<compile_context>
chip_gen: v7x
topology: tpu7x:2x2x1
jax: 0.10.0
libtpu: 0.0.40
codegen_flags: <defaults>
</compile_context>

<pallas_src>
import functools

import jax
import jax.numpy as jnp
import numpy as np
from jax import lax
from jax.experimental import pallas as pl
from jax.experimental.pallas import tpu as pltpu


def _collect_kernel(x_ref, o_ref, *, H, W, i_block):
    """One (batch, i-block) grid step.

    x_ref : (1, 2H-1, 2W-1, H*W)  full over-complete map of one batch element
            (fetched once per batch, resident across the i grid axis).
    o_ref : (1, i_block*W, H*W)   output rows p = i*W + j for i in
            [i0, i0 + i_block); lane dim is q = h*W + w.
    """
    HW = H * W
    i0 = pl.program_id(1) * i_block

    # --- per-lane source coordinates h(q), w(q) with q = h*W + w (no div/mod) ---
    qq = lax.broadcasted_iota(jnp.int32, (H, 1, HW), 2)
    tt = lax.broadcasted_iota(jnp.int32, (H, 1, HW), 0)
    h_of_q = jnp.sum((qq >= (tt + 1) * W).astype(jnp.int32), axis=0, keepdims=True)
    q1 = lax.broadcasted_iota(jnp.int32, (1, 1, HW), 2)
    w_of_q = q1 - W * h_of_q                                         # (1, 1, HW)

    # --- one-hot selection masks (hoisted out of the i loop; i-independent) ---
    # stage A: pick local mask-row a == (H-1) - h(q) from the H-row window [i, i+H)
    aa = lax.broadcasted_iota(jnp.int32, (H, 1, HW), 0)
    mask_row = aa == (H - 1) - h_of_q                                # (H, 1, HW)
    # stage B: pick mask-col dj == j + (W-1) - w(q)
    jj = lax.broadcasted_iota(jnp.int32, (W, 2 * W - 1, HW), 0)
    dd = lax.broadcasted_iota(jnp.int32, (W, 2 * W - 1, HW), 1)
    mask_col = dd == jj + (W - 1) - w_of_q                           # (W, 2W-1, HW)

    for t in range(i_block):  # static unroll; every iteration is fully vectorized
        i = i0 + t
        # Mask rows [i, i+H) cover di = i + (H-1) - h for every source row h.
        xw = x_ref[0, pl.ds(i, H), :, :]                             # (H, 2W-1, HW)
        # row collect: g[dj, q] = xw[H-1-h(q), dj, q]
        g = jnp.sum(jnp.where(mask_row, xw, 0), axis=0)              # (2W-1, HW)
        # col collect: blk[j, q] = g[j + W-1 - w(q), q]
        blk = jnp.sum(jnp.where(mask_col, g[None], 0), axis=1)       # (W, HW)
        o_ref[0, t * W:(t + 1) * W, :] = blk.astype(o_ref.dtype)


def collect_attention(x, *, i_block=None):
    """PSA collect forward. x: [N, C, H, W] with C=(2H-1)*(2W-1) -> [N, H*W, H, W]."""
    N, C, H, W = x.shape
    assert C == (2 * H - 1) * (2 * W - 1), "channels must equal (2H-1)*(2W-1)"
    HW = H * W

    if i_block is None:
        i_block = H               # small problems: one grid step per batch element
    assert H % i_block == 0, "i_block must divide H"
    assert (i_block * W) % 8 == 0 or i_block * W == HW, (
        "output block sublane dim must be 8-aligned (W % 8 == 0 recommended)")

    # Free (contiguous) view -- no HBM transpose pass.
    x4 = x.reshape(N, 2 * H - 1, 2 * W - 1, HW)

    out3 = pl.pallas_call(
        functools.partial(_collect_kernel, H=H, W=W, i_block=i_block),
        out_shape=jax.ShapeDtypeStruct((N, HW, HW), x.dtype),
        grid=(N, H // i_block),
        in_specs=[
            # Full per-batch mask; index map is constant along the i axis, so it
            # is DMA'd once per batch element and stays resident in VMEM.
            pl.BlockSpec((1, 2 * H - 1, 2 * W - 1, HW), lambda n, ib: (n, 0, 0, 0)),
        ],
        out_specs=pl.BlockSpec((1, i_block * W, HW), lambda n, ib: (n, ib, 0)),
        compiler_params=pltpu.CompilerParams(
            dimension_semantics=("parallel", "parallel"),
        ),
    )(x4)

    # Free reshape back to the PyTorch layout [N, H*W, H, W].
    return out3.reshape(N, HW, H, W)


def _reference_collect(x_np):
    """Pure-numpy reference of the PSA collect forward."""
    N, C, H, W = x_np.shape
    xr = x_np.reshape(N, 2 * H - 1, 2 * W - 1, H, W)
    out = np.zeros((N, H * W, H, W), dtype=x_np.dtype)
    for h in range(H):
        for w in range(W):
            win = xr[:, H - 1 - h: 2 * H - 1 - h, W - 1 - w: 2 * W - 1 - w, h, w]
            out[:, :, h, w] = win.reshape(N, H * W)
    return out


if __name__ == "__main__":
    # Small shapes consistent with the module: spatial 8x8 -> C = (2*8-1)^2 = 225.
    N, H, W = 2, 8, 8
    C = (2 * H - 1) * (2 * W - 1)

    key = jax.random.PRNGKey(0)
    x = jax.random.normal(key, (N, C, H, W), dtype=jnp.float32)

    out = collect_attention(x)                    # default: grid (N, 1)
    out = jax.block_until_ready(out)

    ref = _reference_collect(np.asarray(x))
    assert out.shape == (N, H * W, H, W), out.shape
    np.testing.assert_allclose(np.asarray(out), ref, rtol=0, atol=0)

    # Also exercise the multi-step i axis (grid (N, H // i_block)).
    out2 = jax.block_until_ready(collect_attention(x, i_block=4))
    np.testing.assert_allclose(np.asarray(out2), ref, rtol=0, atol=0)

    print("KERNEL_OK")
</pallas_src>

<mosaic_0001>
module attributes {stable_mosaic.version = 11 : i64} {
  func.func @_collect_kernel(%arg0: i32, %arg1: i32, %arg2: memref<1x15x15x64xf32, #tpu.memory_space<vmem>>, %arg3: memref<1x64x64xf32, #tpu.memory_space<vmem>>) attributes {dimension_semantics = [#tpu.dimension_semantics<parallel>, #tpu.dimension_semantics<parallel>], iteration_bounds = array<i64: 2, 1>, scalar_prefetch = 0 : i64, scratch_operands = 0 : i64, tpu.core_type = #tpu.core_type<tc>, window_params = [{transform_indices = @transform_0, window_bounds = array<i64: 1, 15, 15, 64>}, {transform_indices = @transform_1, window_bounds = array<i64: 1, 64, 64>}]} {
    %c8_i32 = arith.constant 8 : i32
    %0 = arith.muli %arg1, %c8_i32 : i32
    %1 = tpu.iota {dimensions = array<i32: 2>} : vector<8x1x64xi32>
    %2 = tpu.iota {dimensions = array<i32: 0>} : vector<8x1x64xi32>
    %c1_i32 = arith.constant 1 : i32
    %3 = vector.broadcast %c1_i32 : i32 to vector<8x1x64xi32>
    %4 = arith.addi %2, %3 : vector<8x1x64xi32>
    %c8_i32_0 = arith.constant 8 : i32
    %5 = vector.broadcast %c8_i32_0 : i32 to vector<8x1x64xi32>
    %6 = arith.muli %4, %5 : vector<8x1x64xi32>
    %7 = arith.cmpi sge, %1, %6 : vector<8x1x64xi32>
    %8 = arith.extui %7 : vector<8x1x64xi1> to vector<8x1x64xi32>
    %cst = arith.constant dense<0> : vector<1x64xi32>
    %9 = vector.multi_reduction <add>, %8, %cst [0] : vector<8x1x64xi32> to vector<1x64xi32>
    %10 = vector.shape_cast %9 : vector<1x64xi32> to vector<1x1x64xi32>
    %11 = tpu.iota {dimensions = array<i32: 2>} : vector<1x1x64xi32>
    %c8_i32_1 = arith.constant 8 : i32
    %12 = vector.broadcast %c8_i32_1 : i32 to vector<1x1x64xi32>
    %13 = arith.muli %12, %10 : vector<1x1x64xi32>
    %14 = arith.subi %11, %13 : vector<1x1x64xi32>
    %15 = tpu.iota {dimensions = array<i32: 0>} : vector<8x1x64xi32>
    %c7_i32 = arith.constant 7 : i32
    %16 = vector.broadcast %c7_i32 : i32 to vector<1x1x64xi32>
    %17 = arith.subi %16, %10 : vector<1x1x64xi32>
    %18 = vector.broadcast %17 : vector<1x1x64xi32> to vector<8x1x64xi32>
    %19 = arith.cmpi eq, %15, %18 : vector<8x1x64xi32>
    %20 = tpu.iota {dimensions = array<i32: 0>} : vector<8x15x64xi32>
    %21 = tpu.iota {dimensions = array<i32: 1>} : vector<8x15x64xi32>
    %c7_i32_2 = arith.constant 7 : i32
    %22 = vector.broadcast %c7_i32_2 : i32 to vector<8x15x64xi32>
    %23 = arith.addi %20, %22 : vector<8x15x64xi32>
    %24 = vector.broadcast %14 : vector<1x1x64xi32> to vector<8x15x64xi32>
    %25 = arith.subi %23, %24 : vector<8x15x64xi32>
    %26 = arith.cmpi eq, %21, %25 : vector<8x15x64xi32>
    %c0_i32 = arith.constant 0 : i32
    %27 = arith.addi %0, %c0_i32 : i32
    %c0 = arith.constant 0 : index
    %28 = arith.index_cast %27 : i32 to index
    %c0_3 = arith.constant 0 : index
    %c0_4 = arith.constant 0 : index
    %29 = vector.load %arg2[%c0, %28, %c0_3, %c0_4] : memref<1x15x15x64xf32, #tpu.memory_space<vmem>>, vector<1x8x15x64xf32>
    %30 = vector.shape_cast %29 : vector<1x8x15x64xf32> to vector<8x15x64xf32>
    %c0_i32_5 = arith.constant 0 : i32
    %31 = arith.sitofp %c0_i32_5 : i32 to f32
    %32 = vector.shape_cast %19 : vector<8x1x64xi1> to vector<8x1x64xi1>
    %33 = vector.broadcast %32 : vector<8x1x64xi1> to vector<8x15x64xi1>
    %34 = vector.broadcast %31 : f32 to vector<8x15x64xf32>
    %35 = arith.select %33, %30, %34 : vector<8x15x64xi1>, vector<8x15x64xf32>
    %cst_6 = arith.constant dense<0.000000e+00> : vector<15x64xf32>
    %36 = vector.multi_reduction <add>, %35, %cst_6 [0] : vector<8x15x64xf32> to vector<15x64xf32>
    %37 = vector.shape_cast %36 : vector<15x64xf32> to vector<1x15x64xf32>
    %c0_i32_7 = arith.constant 0 : i32
    %38 = arith.sitofp %c0_i32_7 : i32 to f32
    %39 = vector.shape_cast %37 : vector<1x15x64xf32> to vector<1x15x64xf32>
    %40 = vector.broadcast %39 : vector<1x15x64xf32> to vector<8x15x64xf32>
    %41 = vector.broadcast %38 : f32 to vector<8x15x64xf32>
    %42 = arith.select %26, %40, %41 : vector<8x15x64xi1>, vector<8x15x64xf32>
    %cst_8 = arith.constant dense<0.000000e+00> : vector<8x64xf32>
    %43 = vector.multi_reduction <add>, %42, %cst_8 [1] : vector<8x15x64xf32> to vector<8x64xf32>
    %c0_9 = arith.constant 0 : index
    %c0_10 = arith.constant 0 : index
    %c0_11 = arith.constant 0 : index
    %44 = vector.load %arg3[%c0_9, %c0_10, %c0_11] : memref<1x64x64xf32, #tpu.memory_space<vmem>>, vector<1x8x64xf32>
    %45 = vector.shape_cast %44 : vector<1x8x64xf32> to vector<8x64xf32>
    %46 = vector.shape_cast %43 : vector<8x64xf32> to vector<1x8x64xf32>
    tpu.vector_store %arg3[%c0_9, %c0_10, %c0_11], %46 {strides = array<i32>} : memref<1x64x64xf32, #tpu.memory_space<vmem>>, vector<1x8x64xf32>,
    %c1_i32_12 = arith.constant 1 : i32
    %47 = arith.addi %0, %c1_i32_12 : i32
    %c0_13 = arith.constant 0 : index
    %48 = arith.index_cast %47 : i32 to index
    %c0_14 = arith.constant 0 : index
    %c0_15 = arith.constant 0 : index
    %49 = vector.load %arg2[%c0_13, %48, %c0_14, %c0_15] : memref<1x15x15x64xf32, #tpu.memory_space<vmem>>, vector<1x8x15x64xf32>
    %50 = vector.shape_cast %49 : vector<1x8x15x64xf32> to vector<8x15x64xf32>
    %c0_i32_16 = arith.constant 0 : i32
    %51 = arith.sitofp %c0_i32_16 : i32 to f32
    %52 = vector.shape_cast %19 : vector<8x1x64xi1> to vector<8x1x64xi1>
    %53 = vector.broadcast %52 : vector<8x1x64xi1> to vector<8x15x64xi1>
    %54 = vector.broadcast %51 : f32 to vector<8x15x64xf32>
    %55 = arith.select %53, %50, %54 : vector<8x15x64xi1>, vector<8x15x64xf32>
    %cst_17 = arith.constant dense<0.000000e+00> : vector<15x64xf32>
    %56 = vector.multi_reduction <add>, %55, %cst_17 [0] : vector<8x15x64xf32> to vector<15x64xf32>
    %57 = vector.shape_cast %56 : vector<15x64xf32> to vector<1x15x64xf32>
    %c0_i32_18 = arith.constant 0 : i32
    %58 = arith.sitofp %c0_i32_18 : i32 to f32
    %59 = vector.shape_cast %57 : vector<1x15x64xf32> to vector<1x15x64xf32>
    %60 = vector.broadcast %59 : vector<1x15x64xf32> to vector<8x15x64xf32>
    %61 = vector.broadcast %58 : f32 to vector<8x15x64xf32>
    %62 = arith.select %26, %60, %61 : vector<8x15x64xi1>, vector<8x15x64xf32>
    %cst_19 = arith.constant dense<0.000000e+00> : vector<8x64xf32>
    %63 = vector.multi_reduction <add>, %62, %cst_19 [1] : vector<8x15x64xf32> to vector<8x64xf32>
    %c0_20 = arith.constant 0 : index
    %c8 = arith.constant 8 : index
    %c0_21 = arith.constant 0 : index
    %64 = vector.load %arg3[%c0_20, %c8, %c0_21] : memref<1x64x64xf32, #tpu.memory_space<vmem>>, vector<1x8x64xf32>
    %65 = vector.shape_cast %64 : vector<1x8x64xf32> to vector<8x64xf32>
    %66 = vector.shape_cast %63 : vector<8x64xf32> to vector<1x8x64xf32>
    tpu.vector_store %arg3[%c0_20, %c8, %c0_21], %66 {strides = array<i32>} : memref<1x64x64xf32, #tpu.memory_space<vmem>>, vector<1x8x64xf32>,
    %c2_i32 = arith.constant 2 : i32
    %67 = arith.addi %0, %c2_i32 : i32
    %c0_22 = arith.constant 0 : index
    %68 = arith.index_cast %67 : i32 to index
    %c0_23 = arith.constant 0 : index
    %c0_24 = arith.constant 0 : index
    %69 = vector.load %arg2[%c0_22, %68, %c0_23, %c0_24] : memref<1x15x15x64xf32, #tpu.memory_space<vmem>>, vector<1x8x15x64xf32>
    %70 = vector.shape_cast %69 : vector<1x8x15x64xf32> to vector<8x15x64xf32>
    %c0_i32_25 = arith.constant 0 : i32
    %71 = arith.sitofp %c0_i32_25 : i32 to f32
    %72 = vector.shape_cast %19 : vector<8x1x64xi1> to vector<8x1x64xi1>
    %73 = vector.broadcast %72 : vector<8x1x64xi1> to vector<8x15x64xi1>
    %74 = vector.broadcast %71 : f32 to vector<8x15x64xf32>
    %75 = arith.select %73, %70, %74 : vector<8x15x64xi1>, vector<8x15x64xf32>
    %cst_26 = arith.constant dense<0.000000e+00> : vector<15x64xf32>
    %76 = vector.multi_reduction <add>, %75, %cst_26 [0] : vector<8x15x64xf32> to vector<15x64xf32>
    %77 = vector.shape_cast %76 : vector<15x64xf32> to vector<1x15x64xf32>
    %c0_i32_27 = arith.constant 0 : i32
    %78 = arith.sitofp %c0_i32_27 : i32 to f32
    %79 = vector.shape_cast %77 : vector<1x15x64xf32> to vector<1x15x64xf32>
    %80 = vector.broadcast %79 : vector<1x15x64xf32> to vector<8x15x64xf32>
    %81 = vector.broadcast %78 : f32 to vector<8x15x64xf32>
    %82 = arith.select %26, %80, %81 : vector<8x15x64xi1>, vector<8x15x64xf32>
    %cst_28 = arith.constant dense<0.000000e+00> : vector<8x64xf32>
    %83 = vector.multi_reduction <add>, %82, %cst_28 [1] : vector<8x15x64xf32> to vector<8x64xf32>
    %c0_29 = arith.constant 0 : index
    %c16 = arith.constant 16 : index
    %c0_30 = arith.constant 0 : index
    %84 = vector.load %arg3[%c0_29, %c16, %c0_30] : memref<1x64x64xf32, #tpu.memory_space<vmem>>, vector<1x8x64xf32>
    %85 = vector.shape_cast %84 : vector<1x8x64xf32> to vector<8x64xf32>
    %86 = vector.shape_cast %83 : vector<8x64xf32> to vector<1x8x64xf32>
    tpu.vector_store %arg3[%c0_29, %c16, %c0_30], %86 {strides = array<i32>} : memref<1x64x64xf32, #tpu.memory_space<vmem>>, vector<1x8x64xf32>,
    %c3_i32 = arith.constant 3 : i32
    %87 = arith.addi %0, %c3_i32 : i32
    %c0_31 = arith.constant 0 : index
    %88 = arith.index_cast %87 : i32 to index
    %c0_32 = arith.constant 0 : index
    %c0_33 = arith.constant 0 : index
    %89 = vector.load %arg2[%c0_31, %88, %c0_32, %c0_33] : memref<1x15x15x64xf32, #tpu.memory_space<vmem>>, vector<1x8x15x64xf32>
    %90 = vector.shape_cast %89 : vector<1x8x15x64xf32> to vector<8x15x64xf32>
    %c0_i32_34 = arith.constant 0 : i32
    %91 = arith.sitofp %c0_i32_34 : i32 to f32
    %92 = vector.shape_cast %19 : vector<8x1x64xi1> to vector<8x1x64xi1>
    %93 = vector.broadcast %92 : vector<8x1x64xi1> to vector<8x15x64xi1>
    %94 = vector.broadcast %91 : f32 to vector<8x15x64xf32>
    %95 = arith.select %93, %90, %94 : vector<8x15x64xi1>, vector<8x15x64xf32>
    %cst_35 = arith.constant dense<0.000000e+00> : vector<15x64xf32>
    %96 = vector.multi_reduction <add>, %95, %cst_35 [0] : vector<8x15x64xf32> to vector<15x64xf32>
    %97 = vector.shape_cast %96 : vector<15x64xf32> to vector<1x15x64xf32>
    %c0_i32_36 = arith.constant 0 : i32
    %98 = arith.sitofp %c0_i32_36 : i32 to f32
    %99 = vector.shape_cast %97 : vector<1x15x64xf32> to vector<1x15x64xf32>
    %100 = vector.broadcast %99 : vector<1x15x64xf32> to vector<8x15x64xf32>
    %101 = vector.broadcast %98 : f32 to vector<8x15x64xf32>
    %102 = arith.select %26, %100, %101 : vector<8x15x64xi1>, vector<8x15x64xf32>
    %cst_37 = arith.constant dense<0.000000e+00> : vector<8x64xf32>
    %103 = vector.multi_reduction <add>, %102, %cst_37 [1] : vector<8x15x64xf32> to vector<8x64xf32>
    %c0_38 = arith.constant 0 : index
    %c24 = arith.constant 24 : index
    %c0_39 = arith.constant 0 : index
    %104 = vector.load %arg3[%c0_38, %c24, %c0_39] : memref<1x64x64xf32, #tpu.memory_space<vmem>>, vector<1x8x64xf32>
    %105 = vector.shape_cast %104 : vector<1x8x64xf32> to vector<8x64xf32>
    %106 = vector.shape_cast %103 : vector<8x64xf32> to vector<1x8x64xf32>
    tpu.vector_store %arg3[%c0_38, %c24, %c0_39], %106 {strides = array<i32>} : memref<1x64x64xf32, #tpu.memory_space<vmem>>, vector<1x8x64xf32>,
    %c4_i32 = arith.constant 4 : i32
    %107 = arith.addi %0, %c4_i32 : i32
    %c0_40 = arith.constant 0 : index
    %108 = arith.index_cast %107 : i32 to index
    %c0_41 = arith.constant 0 : index
    %c0_42 = arith.constant 0 : index
    %109 = vector.load %arg2[%c0_40, %108, %c0_41, %c0_42] : memref<1x15x15x64xf32, #tpu.memory_space<vmem>>, vector<1x8x15x64xf32>
    %110 = vector.shape_cast %109 : vector<1x8x15x64xf32> to vector<8x15x64xf32>
    %c0_i32_43 = arith.constant 0 : i32
    %111 = arith.sitofp %c0_i32_43 : i32 to f32
    %112 = vector.shape_cast %19 : vector<8x1x64xi1> to vector<8x1x64xi1>
    %113 = vector.broadcast %112 : vector<8x1x64xi1> to vector<8x15x64xi1>
    %114 = vector.broadcast %111 : f32 to vector<8x15x64xf32>
    %115 = arith.select %113, %110, %114 : vector<8x15x64xi1>, vector<8x15x64xf32>
    %cst_44 = arith.constant dense<0.000000e+00> : vector<15x64xf32>
    %116 = vector.multi_reduction <add>, %115, %cst_44 [0] : vector<8x15x64xf32> to vector<15x64xf32>
    %117 = vector.shape_cast %116 : vector<15x64xf32> to vector<1x15x64xf32>
    %c0_i32_45 = arith.constant 0 : i32
    %118 = arith.sitofp %c0_i32_45 : i32 to f32
    %119 = vector.shape_cast %117 : vector<1x15x64xf32> to vector<1x15x64xf32>
    %120 = vector.broadcast %119 : vector<1x15x64xf32> to vector<8x15x64xf32>
    %121 = vector.broadcast %118 : f32 to vector<8x15x64xf32>
    %122 = arith.select %26, %120, %121 : vector<8x15x64xi1>, vector<8x15x64xf32>
    %cst_46 = arith.constant dense<0.000000e+00> : vector<8x64xf32>
    %123 = vector.multi_reduction <add>, %122, %cst_46 [1] : vector<8x15x64xf32> to vector<8x64xf32>
    %c0_47 = arith.constant 0 : index
    %c32 = arith.constant 32 : index
    %c0_48 = arith.constant 0 : index
    %124 = vector.load %arg3[%c0_47, %c32, %c0_48] : memref<1x64x64xf32, #tpu.memory_space<vmem>>, vector<1x8x64xf32>
    %125 = vector.shape_cast %124 : vector<1x8x64xf32> to vector<8x64xf32>
    %126 = vector.shape_cast %123 : vector<8x64xf32> to vector<1x8x64xf32>
    tpu.vector_store %arg3[%c0_47, %c32, %c0_48], %126 {strides = array<i32>} : memref<1x64x64xf32, #tpu.memory_space<vmem>>, vector<1x8x64xf32>,
    %c5_i32 = arith.constant 5 : i32
    %127 = arith.addi %0, %c5_i32 : i32
    %c0_49 = arith.constant 0 : index
    %128 = arith.index_cast %127 : i32 to index
    %c0_50 = arith.constant 0 : index
    %c0_51 = arith.constant 0 : index
    %129 = vector.load %arg2[%c0_49, %128, %c0_50, %c0_51] : memref<1x15x15x64xf32, #tpu.memory_space<vmem>>, vector<1x8x15x64xf32>
    %130 = vector.shape_cast %129 : vector<1x8x15x64xf32> to vector<8x15x64xf32>
    %c0_i32_52 = arith.constant 0 : i32
    %131 = arith.sitofp %c0_i32_52 : i32 to f32
    %132 = vector.shape_cast %19 : vector<8x1x64xi1> to vector<8x1x64xi1>
    %133 = vector.broadcast %132 : vector<8x1x64xi1> to vector<8x15x64xi1>
    %134 = vector.broadcast %131 : f32 to vector<8x15x64xf32>
    %135 = arith.select %133, %130, %134 : vector<8x15x64xi1>, vector<8x15x64xf32>
    %cst_53 = arith.constant dense<0.000000e+00> : vector<15x64xf32>
    %136 = vector.multi_reduction <add>, %135, %cst_53 [0] : vector<8x15x64xf32> to vector<15x64xf32>
    %137 = vector.shape_cast %136 : vector<15x64xf32> to vector<1x15x64xf32>
    %c0_i32_54 = arith.constant 0 : i32
    %138 = arith.sitofp %c0_i32_54 : i32 to f32
    %139 = vector.shape_cast %137 : vector<1x15x64xf32> to vector<1x15x64xf32>
    %140 = vector.broadcast %139 : vector<1x15x64xf32> to vector<8x15x64xf32>
    %141 = vector.broadcast %138 : f32 to vector<8x15x64xf32>
    %142 = arith.select %26, %140, %141 : vector<8x15x64xi1>, vector<8x15x64xf32>
    %cst_55 = arith.constant dense<0.000000e+00> : vector<8x64xf32>
    %143 = vector.multi_reduction <add>, %142, %cst_55 [1] : vector<8x15x64xf32> to vector<8x64xf32>
    %c0_56 = arith.constant 0 : index
    %c40 = arith.constant 40 : index
    %c0_57 = arith.constant 0 : index
    %144 = vector.load %arg3[%c0_56, %c40, %c0_57] : memref<1x64x64xf32, #tpu.memory_space<vmem>>, vector<1x8x64xf32>
    %145 = vector.shape_cast %144 : vector<1x8x64xf32> to vector<8x64xf32>
    %146 = vector.shape_cast %143 : vector<8x64xf32> to vector<1x8x64xf32>
    tpu.vector_store %arg3[%c0_56, %c40, %c0_57], %146 {strides = array<i32>} : memref<1x64x64xf32, #tpu.memory_space<vmem>>, vector<1x8x64xf32>,
    %c6_i32 = arith.constant 6 : i32
    %147 = arith.addi %0, %c6_i32 : i32
    %c0_58 = arith.constant 0 : index
    %148 = arith.index_cast %147 : i32 to index
    %c0_59 = arith.constant 0 : index
    %c0_60 = arith.constant 0 : index
    %149 = vector.load %arg2[%c0_58, %148, %c0_59, %c0_60] : memref<1x15x15x64xf32, #tpu.memory_space<vmem>>, vector<1x8x15x64xf32>
    %150 = vector.shape_cast %149 : vector<1x8x15x64xf32> to vector<8x15x64xf32>
    %c0_i32_61 = arith.constant 0 : i32
    %151 = arith.sitofp %c0_i32_61 : i32 to f32
    %152 = vector.shape_cast %19 : vector<8x1x64xi1> to vector<8x1x64xi1>
    %153 = vector.broadcast %152 : vector<8x1x64xi1> to vector<8x15x64xi1>
    %154 = vector.broadcast %151 : f32 to vector<8x15x64xf32>
    %155 = arith.select %153, %150, %154 : vector<8x15x64xi1>, vector<8x15x64xf32>
    %cst_62 = arith.constant dense<0.000000e+00> : vector<15x64xf32>
    %156 = vector.multi_reduction <add>, %155, %cst_62 [0] : vector<8x15x64xf32> to vector<15x64xf32>
    %157 = vector.shape_cast %156 : vector<15x64xf32> to vector<1x15x64xf32>
    %c0_i32_63 = arith.constant 0 : i32
    %158 = arith.sitofp %c0_i32_63 : i32 to f32
    %159 = vector.shape_cast %157 : vector<1x15x64xf32> to vector<1x15x64xf32>
    %160 = vector.broadcast %159 : vector<1x15x64xf32> to vector<8x15x64xf32>
    %161 = vector.broadcast %158 : f32 to vector<8x15x64xf32>
    %162 = arith.select %26, %160, %161 : vector<8x15x64xi1>, vector<8x15x64xf32>
    %cst_64 = arith.constant dense<0.000000e+00> : vector<8x64xf32>
    %163 = vector.multi_reduction <add>, %162, %cst_64 [1] : vector<8x15x64xf32> to vector<8x64xf32>
    %c0_65 = arith.constant 0 : index
    %c48 = arith.constant 48 : index
    %c0_66 = arith.constant 0 : index
    %164 = vector.load %arg3[%c0_65, %c48, %c0_66] : memref<1x64x64xf32, #tpu.memory_space<vmem>>, vector<1x8x64xf32>
    %165 = vector.shape_cast %164 : vector<1x8x64xf32> to vector<8x64xf32>
    %166 = vector.shape_cast %163 : vector<8x64xf32> to vector<1x8x64xf32>
    tpu.vector_store %arg3[%c0_65, %c48, %c0_66], %166 {strides = array<i32>} : memref<1x64x64xf32, #tpu.memory_space<vmem>>, vector<1x8x64xf32>,
    %c7_i32_67 = arith.constant 7 : i32
    %167 = arith.addi %0, %c7_i32_67 : i32
    %c0_68 = arith.constant 0 : index
    %168 = arith.index_cast %167 : i32 to index
    %c0_69 = arith.constant 0 : index
    %c0_70 = arith.constant 0 : index
    %169 = vector.load %arg2[%c0_68, %168, %c0_69, %c0_70] : memref<1x15x15x64xf32, #tpu.memory_space<vmem>>, vector<1x8x15x64xf32>
    %170 = vector.shape_cast %169 : vector<1x8x15x64xf32> to vector<8x15x64xf32>
    %c0_i32_71 = arith.constant 0 : i32
    %171 = arith.sitofp %c0_i32_71 : i32 to f32
    %172 = vector.shape_cast %19 : vector<8x1x64xi1> to vector<8x1x64xi1>
    %173 = vector.broadcast %172 : vector<8x1x64xi1> to vector<8x15x64xi1>
    %174 = vector.broadcast %171 : f32 to vector<8x15x64xf32>
    %175 = arith.select %173, %170, %174 : vector<8x15x64xi1>, vector<8x15x64xf32>
    %cst_72 = arith.constant dense<0.000000e+00> : vector<15x64xf32>
    %176 = vector.multi_reduction <add>, %175, %cst_72 [0] : vector<8x15x64xf32> to vector<15x64xf32>
    %177 = vector.shape_cast %176 : vector<15x64xf32> to vector<1x15x64xf32>
    %c0_i32_73 = arith.constant 0 : i32
    %178 = arith.sitofp %c0_i32_73 : i32 to f32
    %179 = vector.shape_cast %177 : vector<1x15x64xf32> to vector<1x15x64xf32>
    %180 = vector.broadcast %179 : vector<1x15x64xf32> to vector<8x15x64xf32>
    %181 = vector.broadcast %178 : f32 to vector<8x15x64xf32>
    %182 = arith.select %26, %180, %181 : vector<8x15x64xi1>, vector<8x15x64xf32>
    %cst_74 = arith.constant dense<0.000000e+00> : vector<8x64xf32>
    %183 = vector.multi_reduction <add>, %182, %cst_74 [1] : vector<8x15x64xf32> to vector<8x64xf32>
    %c0_75 = arith.constant 0 : index
    %c56 = arith.constant 56 : index
    %c0_76 = arith.constant 0 : index
    %184 = vector.load %arg3[%c0_75, %c56, %c0_76] : memref<1x64x64xf32, #tpu.memory_space<vmem>>, vector<1x8x64xf32>
    %185 = vector.shape_cast %184 : vector<1x8x64xf32> to vector<8x64xf32>
    %186 = vector.shape_cast %183 : vector<8x64xf32> to vector<1x8x64xf32>
    tpu.vector_store %arg3[%c0_75, %c56, %c0_76], %186 {strides = array<i32>} : memref<1x64x64xf32, #tpu.memory_space<vmem>>, vector<1x8x64xf32>,
    return
  }
  func.func @transform_0(%arg0: i32, %arg1: i32) -> (i32, i32, i32, i32) {
    %c0_i32 = arith.constant 0 : i32
    %c0_i32_0 = arith.constant 0 : i32
    %c0_i32_1 = arith.constant 0 : i32
    %c0_i32_2 = arith.constant 0 : i32
    return %arg0, %c0_i32, %c0_i32_0, %c0_i32_1 : i32, i32, i32, i32
  }
  func.func @transform_1(%arg0: i32, %arg1: i32) -> (i32, i32, i32) {
    %c0_i32 = arith.constant 0 : i32
    %c0_i32_0 = arith.constant 0 : i32
    return %arg0, %arg1, %c0_i32 : i32, i32, i32
  }
}

</mosaic_0001>

<llo_original>
// kernel: tpu_custom_call.1
$region0: #{tpu_custom_call.1}
  #allocation0 [shape = 'u32[]', space=smem, size = 0x4, offset = 0x4, fixed_abs, tag = 'smem constant byte address 0x4 - core index']
  #allocation1 [shape = 'u32[144,128]{1,0:T(1,128)}', space=vmem, size = 0x12000, scoped, tag = 'internal scratch']
  %s0 = inlined_call_operand.vmem [shape: f32[2,15,15,64], index: 0, kind: input, shape index: {}]
  %s1 = inlined_call_operand.hbm [shape: f32[2,64,64], index: 1, kind: output, shape index: {}]
  %s2 = sld [smem:[#allocation0]]
  $region37: #{tpu_custom_call.1} parent=0
    _
  %s4 = ssub.s32 1, %s2
  %s5 = scalar_select 0, %s4, %s2
  $region1: #{tpu_custom_call.1} parent=0
    #allocation2 [shape = 'u8[65536]{0}', space=vmem, size = 0x10000, scoped, tag = 'output window, operand 0']
    #allocation3 [shape = 's32[2]{0}', space=sflag, size = 0x8, scoped, tag = 'scoped memory for tpu_custom_call.1']
    %6 = vsyncpa [#allocation3], 0
    %s7 = scalar_lea.sflag [#allocation3], 1
    %8 = vsyncpa %s7, 0
    loop: start=0, step=1, limit=4
    $region2: #{tpu_custom_call.1} parent=1 // loop_pre_header
      _
    $region3: #{tpu_custom_call.1} parent=1 // loop_header
      %s10 = sphi 0, %s14
      %p11 = scmp.ge.s32.totalorder %s10, 4
      %s17 = sphi 0, %s29
      %s18 = sphi 0, %s25
      %s19 = sphi 0, %s17
      %s20 = sphi 0, %s18
      %s21 = sphi 0, %s19
      %s22 = sphi 0, %s20
      %s32 = sphi 0, %s34
      %s35 = sphi 0, %s32
      %s36 = sphi 0, %s35
      %s52 = sphi 0, %s36
      %s60 = sphi 0, %s62
      %s63 = sphi 0, %s60
      %s64 = sphi 0, %s63
      %s80 = sphi 0, %s64
    $region4: #{tpu_custom_call.1} parent=1 // loop_header_branch
      %13 = sbr.rel (%p11) target = $region8
    $region5: #{tpu_custom_call.1} parent=1 // loop_body
      %s15 = ssub.s32 %s10, 1
      %s16 = ssub.s32 %s10, 2
      %s23 = sadd.s32 1, %s18
      %p24 = scmp.ge.s32.totalorder %s23, 1
      %s25 = scalar_select %p24, 0, %s23
      %s26 = sadd.s32 1, %s17
      %s27 = scalar_select %p24, %s26, %s17
      %p28 = scmp.ge.s32.totalorder %s27, 2
      %s29 = scalar_select %p28, 0, %s27
      %s30 = ssub.s32 %s17, %s29
      %p31 = scmp.eq.s32.totalorder %s30, 0
      %s33 = sadd.s32 %s32, 1
      %s34 = scalar_select %p31, %s32, %s33
      %p37 = pneg %p31
      %p38 = scmp.eq.s32.totalorder %s10, 1
      %p39 = por %p37, %p38
      %p40 = scmp.ne.s32.totalorder %s32, %s35
      %p41 = scmp.eq.s32.totalorder %s10, 0
      %p42 = por %p40, %p41
      %p43 = scmp.ne.s32.totalorder %s32, %s35
      %p44 = scmp.eq.s32.totalorder %s15, 1
      %p45 = por %p43, %p44
      %p46 = scmp.ne.s32.totalorder %s35, %s36
      %p47 = scmp.eq.s32.totalorder %s15, 0
      %p48 = por %p46, %p47
      %p49 = scmp.ne.s32.totalorder %s35, %s36
      %p50 = scmp.eq.s32.totalorder %s16, 1
      %p51 = por %p49, %p50
      %p53 = scmp.ne.s32.totalorder %s36, %s52
      %p54 = scmp.eq.s32.totalorder %s16, 0
      %p55 = por %p53, %p54
      %s56 = ssub.s32 %s17, %s29
      %s57 = ssub.s32 %s18, %s25
      %s58 = sor.u32 %s56, %s57
      %p59 = scmp.eq.s32.totalorder %s58, 0
      %s61 = sadd.s32 %s60, 1
      %s62 = scalar_select %p59, %s60, %s61
      %p65 = pneg %p59
      %p66 = scmp.eq.s32.totalorder %s10, 1
      %p67 = por %p65, %p66
      %p68 = scmp.ne.s32.totalorder %s60, %s63
      %p69 = scmp.eq.s32.totalorder %s10, 0
      %p70 = por %p68, %p69
      %p71 = scmp.ne.s32.totalorder %s60, %s63
      %p72 = scmp.eq.s32.totalorder %s15, 1
      %p73 = por %p71, %p72
      %p74 = scmp.ne.s32.totalorder %s63, %s64
      %p75 = scmp.eq.s32.totalorder %s15, 0
      %p76 = por %p74, %p75
      %p77 = scmp.ne.s32.totalorder %s63, %s64
      %p78 = scmp.eq.s32.totalorder %s16, 1
      %p79 = por %p77, %p78
      %p81 = scmp.ne.s32.totalorder %s64, %s80
      %p82 = scmp.eq.s32.totalorder %s16, 0
      %p83 = por %p81, %p82
      %p84 = scmp.le.s32.totalorder 1, %s10
      %p85 = scmp.lt.s32.totalorder %s10, 3
      %p86 = pnand %p84, %p85
      %p87 = pneg %p86
      // Predicated region
      $region9: #{tpu_custom_call.1} parent=5 // pred_check
        _
      $region10: #{tpu_custom_call.1} parent=5 // pred_check_branch
        %89 = sbr.rel (%p86) target = $region12
      $region11: #{tpu_custom_call.1} parent=5 // pred_region
        %s90 = ssub.s32 %s10, 1
      $region12: #{tpu_custom_call.1} parent=5 // pred_fallthru
        _
      %p91 = scmp.lt.s32.totalorder %s10, 2
      // Predicated region
      $region13: #{tpu_custom_call.1} parent=5 // pred_check
        %p92 = pneg %p91
      $region14: #{tpu_custom_call.1} parent=5 // pred_check_branch
        %94 = sbr.rel (%p92) target = $region16
      $region15: #{tpu_custom_call.1} parent=5 // pred_region
        // Predicated region
        $region17: #{tpu_custom_call.1} parent=15 // pred_check
          %p95 = pneg %p42
        $region18: #{tpu_custom_call.1} parent=15 // pred_check_branch
          %97 = sbr.rel (%p95) target = $region20
        $region19: #{tpu_custom_call.1} parent=15 // pred_region
          %p98 = scmp.lt.s32.totalorder %s17, 1
          %s99 = scalar_select %p98, %s17, 1
          %s100 = smul.addr %s99, 30
          %s101 = smul.addr %s100, 8
          %s102 = scalar_lea.vmem %s0, %s101
        $region20: #{tpu_custom_call.1} parent=15 // pred_fallthru
          _
      $region16: #{tpu_custom_call.1} parent=5 // pred_fallthru
        _
      %p103 = scmp.le.s32.totalorder 1, %s10
      %p104 = scmp.lt.s32.totalorder %s10, 3
      %p105 = pnand %p103, %p104
      %p106 = pneg %p105
      // Predicated region
      $region21: #{tpu_custom_call.1} parent=5 // pred_check
        _
      $region22: #{tpu_custom_call.1} parent=5 // pred_check_branch
        %108 = sbr.rel (%p105) target = $region24
      $region23: #{tpu_custom_call.1} parent=5 // pred_region
        %s109 = ssub.s32 %s10, 1
        %p110 = scmp.lt.s32.totalorder %s19, 1
        %s111 = scalar_select %p110, %s19, 1
        %s112 = smul.addr %s111, 30
        %s113 = smul.addr %s112, 8
        %s114 = scalar_lea.vmem %s0, %s113
        %p115 = pneg %p48
        %p116 = pneg %p45
        %p117 = pneg %p76
        %p118 = pneg %p73
        %s119 = sand.u32 %s63, 1
        %s120 = scalar_lea.sflag [#allocation3], %s119
        %s121 = sand.u32 %s63, 1
        %s122 = smul.addr %s121, 64
        %s123 = scalar_lea.vmem [#allocation2], %s122
        %p124 = scmp.lt.s32.totalorder %s19, 1
        %s125 = scalar_select %p124, %s19, 1
        %s126 = smul.addr %s125, 30
        %s127 = smul.addr %s126, 8
        %s128 = scalar_lea.vmem %s0, %s127
        %s129 = smul.u32 8, %s20
        %s130 = smul.u32 %s20, 8
        %v131 = vlaneseq
        %v132 = vand.u32 %v131, 127
        %vm133 = vcmp.ge.s32.totalorder %v132, 8
        %vm134 = vcmp.ge.s32.totalorder %v132, 16
        %vm135 = vcmp.ge.s32.totalorder %v132, 24
        %vm136 = vcmp.ge.s32.totalorder %v132, 32
        %vm137 = vcmp.ge.s32.totalorder %v132, 40
        %vm138 = vcmp.ge.s32.totalorder %v132, 48
        %vm139 = vcmp.ge.s32.totalorder %v132, 56
        %vm140 = vcmp.ge.s32.totalorder %v132, 64
        %v141 = vsel %vm133, 1, 0
        %v142 = vsel %vm134, 1, 0
        %v143 = vsel %vm135, 1, 0
        %v144 = vsel %vm136, 1, 0
        %v145 = vsel %vm137, 1, 0
        %v146 = vsel %vm138, 1, 0
        %v147 = vsel %vm139, 1, 0
        %v148 = vsel %vm140, 1, 0
        %vm149 = vcmask 523264
        %v150 = vsel %vm149, %v141, 0
        %v151 = vsel %vm149, %v142, 0
        %v152 = vsel %vm149, %v143, 0
        %v153 = vsel %vm149, %v144, 0
        %v154 = vsel %vm149, %v145, 0
        %v155 = vadd.s32 %v150, %v154
        %v156 = vsel %vm149, %v146, 0
        %v157 = vadd.s32 %v151, %v156
        %v158 = vsel %vm149, %v147, 0
        %v159 = vadd.s32 %v152, %v158
        %v160 = vsel %vm149, %v148, 0
        %v161 = vadd.s32 %v153, %v160
        %v162 = vadd.s32 %v155, %v157
        %v163 = vadd.s32 %v159, %v161
        %v164 = vadd.s32 %v162, %v163
        %v165 = vmul.u32 %v164, 8
        %v166 = vsub.s32 %v132, %v165
        %v167 = vsub.s32 7, %v164
        %vm168 = vcmp.eq.s32.totalorder %v167, 0
        %vm169 = vcmp.eq.s32.totalorder %v167, 1
        %vm170 = vcmp.eq.s32.totalorder %v167, 2
        %vm171 = vcmp.eq.s32.totalorder %v167, 3
        %vm172 = vcmp.eq.s32.totalorder %v167, 4
        %vm173 = vcmp.eq.s32.totalorder %v167, 5
        %vm174 = vcmp.eq.s32.totalorder %v167, 6
        %vm175 = vcmp.eq.s32.totalorder %v167, 7
        %v176 = vlaneseq
        %v177 = vshrl.u32 %v176, 7
        %v178 = vadd.s32 %v177, 8
        %v179 = vsub.s32 7, %v166
        %v180 = vsub.s32 8, %v166
        %v181 = vsub.s32 9, %v166
        %v182 = vsub.s32 10, %v166
        %v183 = vsub.s32 11, %v166
        %v184 = vsub.s32 12, %v166
        %v185 = vsub.s32 13, %v166
        %v186 = vsub.s32 14, %v166
        %vm187 = vcmp.eq.s32.totalorder %v177, %v179
        %vm188 = vcmp.eq.s32.totalorder %v178, %v179
        %vm189 = vcmp.eq.s32.totalorder %v177, %v180
        %vm190 = vcmp.eq.s32.totalorder %v178, %v180
        %vm191 = vcmp.eq.s32.totalorder %v177, %v181
        %vm192 = vcmp.eq.s32.totalorder %v178, %v181
        %vm193 = vcmp.eq.s32.totalorder %v177, %v182
        %vm194 = vcmp.eq.s32.totalorder %v178, %v182
        %vm195 = vcmp.eq.s32.totalorder %v177, %v183
        %vm196 = vcmp.eq.s32.totalorder %v178, %v183
        %vm197 = vcmp.eq.s32.totalorder %v177, %v184
        %vm198 = vcmp.eq.s32.totalorder %v178, %v184
        %vm199 = vcmp.eq.s32.totalorder %v177, %v185
        %vm200 = vcmp.eq.s32.totalorder %v178, %v185
        %vm201 = vcmp.eq.s32.totalorder %v177, %v186
        %vm202 = vcmp.eq.s32.totalorder %v178, %v186
        %s203 = smul.u32 %s130, 16
        %s204 = scalar_lea.vmem %s128, %s203
        %v205 = vld [vmem:[%s204] sm:$0xff]
        %v206 = vld [vmem:[%s204 + $0x8] sm:$0x7f]
        %v207 = vld [vmem:[%s204 + $0x10] sm:$0xff]
        %v208 = vld [vmem:[%s204 + $0x18] sm:$0x7f]
        %v209 = vld [vmem:[%s204 + $0x20] sm:$0xff]
        %v210 = vld [vmem:[%s204 + $0x28] sm:$0x7f]
        %v211 = vld [vmem:[%s204 + $0x30] sm:$0xff]
        %v212 = vld [vmem:[%s204 + $0x38] sm:$0x7f]
        %v213 = vld [vmem:[%s204 + $0x40] sm:$0xff]
        %v214 = vld [vmem:[%s204 + $0x48] sm:$0x7f]
        %v215 = vld [vmem:[%s204 + $0x50] sm:$0xff]
        %v216 = vld [vmem:[%s204 + $0x58] sm:$0x7f]
        %v217 = vld [vmem:[%s204 + $0x60] sm:$0xff]
        %v218 = vld [vmem:[%s204 + $0x68] sm:$0x7f]
        %v219 = vld [vmem:[%s204 + $0x70] sm:$0xff]
        %v220 = vld [vmem:[%s204 + $0x78] sm:$0x7f]
        %v221 = vsel %vm168, 1, 0
        %v222 = vsel %vm169, 1, 0
        %v223 = vsel %vm170, 1, 0
        %v224 = vsel %vm171, 1, 0
        %v225 = vsel %vm172, 1, 0
        %v226 = vsel %vm173, 1, 0
        %v227 = vsel %vm174, 1, 0
        %v228 = vsel %vm175, 1, 0
        %vm229 = vcmp.eq.s32.totalorder %v221, 1
        %vm230 = vcmp.eq.s32.totalorder %v222, 1
        %vm231 = vcmp.eq.s32.totalorder %v223, 1
        %vm232 = vcmp.eq.s32.totalorder %v224, 1
        %vm233 = vcmp.eq.s32.totalorder %v225, 1
        %vm234 = vcmp.eq.s32.totalorder %v226, 1
        %vm235 = vcmp.eq.s32.totalorder %v227, 1
        %vm236 = vcmp.eq.s32.totalorder %v228, 1
        %v237 = vsel %vm229, %v205, 0.0
        %v238 = vsel %vm229, %v206, 0.0
        %v239 = vsel %vm230, %v207, 0.0
        %v240 = vsel %vm230, %v208, 0.0
        %v241 = vsel %vm231, %v209, 0.0
        %v242 = vsel %vm231, %v210, 0.0
        %v243 = vsel %vm232, %v211, 0.0
        %v244 = vsel %vm232, %v212, 0.0
        %v245 = vsel %vm233, %v213, 0.0
        %v246 = vsel %vm233, %v214, 0.0
        %v247 = vsel %vm234, %v215, 0.0
        %v248 = vsel %vm234, %v216, 0.0
        %v249 = vsel %vm235, %v217, 0.0
        %v250 = vsel %vm235, %v218, 0.0
        %v251 = vsel %vm236, %v219, 0.0
        %v252 = vsel %vm236, %v220, 0.0
        %v253 = vsel %vm149, %v237, 0.0
        %v254 = vsel %vm149, %v239, 0.0
        %v255 = vadd.f32 %v253, %v254
        %v256 = vsel %vm149, %v241, 0.0
        %v257 = vadd.f32 %v255, %v256
        %v258 = vsel %vm149, %v243, 0.0
        %v259 = vadd.f32 %v257, %v258
        %v260 = vsel %vm149, %v245, 0.0
        %v261 = vadd.f32 %v259, %v260
        %v262 = vsel %vm149, %v247, 0.0
        %v263 = vadd.f32 %v261, %v262
        %v264 = vsel %vm149, %v249, 0.0
        %v265 = vadd.f32 %v263, %v264
        %v266 = vsel %vm149, %v251, 0.0
        %v267 = vadd.f32 %v265, %v266
        %vm268 = vcmask 522240
        %v269 = vsel %vm268, %v238, 0.0
        %v270 = vsel %vm268, %v240, 0.0
        %v271 = vadd.f32 %v269, %v270
        %v272 = vsel %vm268, %v242, 0.0
        %v273 = vadd.f32 %v271, %v272
        %v274 = vsel %vm268, %v244, 0.0
        %v275 = vadd.f32 %v273, %v274
        %v276 = vsel %vm268, %v246, 0.0
        %v277 = vadd.f32 %v275, %v276
        %v278 = vsel %vm268, %v248, 0.0
        %v279 = vadd.f32 %v277, %v278
        %v280 = vsel %vm268, %v250, 0.0
        %v281 = vadd.f32 %v279, %v280
        %v282 = vsel %vm268, %v252, 0.0
        %v283 = vadd.f32 %v281, %v282
        %v284 = vsel %vm187, %v267, 0.0
        %v285 = vsel %vm188, %v283, 0.0
        %v286 = vsel %vm189, %v267, 0.0
        %v287 = vsel %vm190, %v283, 0.0
        %v288 = vsel %vm191, %v267, 0.0
        %v289 = vsel %vm192, %v283, 0.0
        %v290 = vsel %vm193, %v267, 0.0
        %v291 = vsel %vm194, %v283, 0.0
        %v292 = vsel %vm195, %v267, 0.0
        %v293 = vsel %vm196, %v283, 0.0
        %v294 = vsel %vm197, %v267, 0.0
        %v295 = vsel %vm198, %v283, 0.0
        %v296 = vsel %vm199, %v267, 0.0
        %v297 = vsel %vm200, %v283, 0.0
        %v298 = vsel %vm201, %v267, 0.0
        %v299 = vsel %vm202, %v283, 0.0
        %v300 = vsel %vm149, %v284, 0.0
        %v301 = vsel %vm268, %v285, 0.0
        %v302 = vadd.f32 %v300, %v301
        %v303 = vrot.slane %v302, 4
        %v304 = vadd.f32 %v302, %v303
        %v305 = vrot.slane %v304, 2
        %v306 = vadd.f32 %v304, %v305
        %v307 = vrot.slane %v306, 1
        %v308 = vadd.f32 %v306, %v307
        %v309 = vsel %vm149, %v286, 0.0
        %v310 = vsel %vm268, %v287, 0.0
        %v311 = vadd.f32 %v309, %v310
        %v312 = vrot.slane %v311, 4
        %v313 = vadd.f32 %v311, %v312
        %v314 = vrot.slane %v313, 2
        %v315 = vadd.f32 %v313, %v314
        %v316 = vrot.slane %v315, 1
        %v317 = vadd.f32 %v315, %v316
        %v318 = vsel %vm149, %v288, 0.0
        %v319 = vsel %vm268, %v289, 0.0
        %v320 = vadd.f32 %v318, %v319
        %v321 = vrot.slane %v320, 4
        %v322 = vadd.f32 %v320, %v321
        %v323 = vrot.slane %v322, 2
        %v324 = vadd.f32 %v322, %v323
        %v325 = vrot.slane %v324, 1
        %v326 = vadd.f32 %v324, %v325
        %v327 = vsel %vm149, %v290, 0.0
        %v328 = vsel %vm268, %v291, 0.0
        %v329 = vadd.f32 %v327, %v328
        %v330 = vrot.slane %v329, 4
        %v331 = vadd.f32 %v329, %v330
        %v332 = vrot.slane %v331, 2
        %v333 = vadd.f32 %v331, %v332
        %v334 = vrot.slane %v333, 1
        %v335 = vadd.f32 %v333, %v334
        %v336 = vsel %vm149, %v292, 0.0
        %v337 = vsel %vm268, %v293, 0.0
        %v338 = vadd.f32 %v336, %v337
        %v339 = vrot.slane %v338, 4
        %v340 = vadd.f32 %v338, %v339
        %v341 = vrot.slane %v340, 2
        %v342 = vadd.f32 %v340, %v341
        %v343 = vrot.slane %v342, 1
        %v344 = vadd.f32 %v342, %v343
        %v345 = vsel %vm149, %v294, 0.0
        %v346 = vsel %vm268, %v295, 0.0
        %v347 = vadd.f32 %v345, %v346
        %v348 = vrot.slane %v347, 4
        %v349 = vadd.f32 %v347, %v348
        %v350 = vrot.slane %v349, 2
        %v351 = vadd.f32 %v349, %v350
        %v352 = vrot.slane %v351, 1
        %v353 = vadd.f32 %v351, %v352
        %v354 = vsel %vm149, %v296, 0.0
        %v355 = vsel %vm268, %v297, 0.0
        %v356 = vadd.f32 %v354, %v355
        %v357 = vrot.slane %v356, 4
        %v358 = vadd.f32 %v356, %v357
        %v359 = vrot.slane %v358, 2
        %v360 = vadd.f32 %v358, %v359
        %v361 = vrot.slane %v360, 1
        %v362 = vadd.f32 %v360, %v361
        %v363 = vsel %vm149, %v298, 0.0
        %v364 = vsel %vm268, %v299, 0.0
        %v365 = vadd.f32 %v363, %v364
        %v366 = vrot.slane %v365, 4
        %v367 = vadd.f32 %v365, %v366
        %v368 = vrot.slane %v367, 2
        %v369 = vadd.f32 %v367, %v368
        %v370 = vrot.slane %v369, 1
        %v371 = vadd.f32 %v369, %v370
        %vm380 = vcmask 1041409
        %v381 = vsel %vm380, %v317, %v308
        %vm382 = vcmask 1042434
        %v383 = vsel %vm382, %v326, %v381
        %vm384 = vcmask 1043459
        %v385 = vsel %vm384, %v335, %v383
        %vm386 = vcmask 1044484
        %v387 = vsel %vm386, %v344, %v385
        %vm388 = vcmask 1045509
        %v389 = vsel %vm388, %v353, %v387
        %vm390 = vcmask 1046534
        %v391 = vsel %vm390, %v362, %v389
        %vm392 = vcmask 1047559
        %v393 = vsel %vm392, %v371, %v391
        %395 = vst.msk [vmem:[%s123] sm:$0xff] %vm149, %v393
        %s396 = sadd.s32 %s130, 1
        %s397 = smul.u32 %s396, 16
        %s398 = scalar_lea.vmem %s128, %s397
        %v399 = vld [vmem:[%s398] sm:$0xff]
        %v400 = vld [vmem:[%s398 + $0x8] sm:$0x7f]
        %v401 = vld [vmem:[%s398 + $0x10] sm:$0xff]
        %v402 = vld [vmem:[%s398 + $0x18] sm:$0x7f]
        %v403 = vld [vmem:[%s398 + $0x20] sm:$0xff]
        %v404 = vld [vmem:[%s398 + $0x28] sm:$0x7f]
        %v405 = vld [vmem:[%s398 + $0x30] sm:$0xff]
        %v406 = vld [vmem:[%s398 + $0x38] sm:$0x7f]
        %v407 = vld [vmem:[%s398 + $0x40] sm:$0xff]
        %v408 = vld [vmem:[%s398 + $0x48] sm:$0x7f]
        %v409 = vld [vmem:[%s398 + $0x50] sm:$0xff]
        %v410 = vld [vmem:[%s398 + $0x58] sm:$0x7f]
        %v411 = vld [vmem:[%s398 + $0x60] sm:$0xff]
        %v412 = vld [vmem:[%s398 + $0x68] sm:$0x7f]
        %v413 = vld [vmem:[%s398 + $0x70] sm:$0xff]
        %v414 = vld [vmem:[%s398 + $0x78] sm:$0x7f]
        %v415 = vsel %vm229, %v399, 0.0
        %v416 = vsel %vm229, %v400, 0.0
        %v417 = vsel %vm230, %v401, 0.0
        %v418 = vsel %vm230, %v402, 0.0
        %v419 = vsel %vm231, %v403, 0.0
        %v420 = vsel %vm231, %v404, 0.0
        %v421 = vsel %vm232, %v405, 0.0
        %v422 = vsel %vm232, %v406, 0.0
        %v423 = vsel %vm233, %v407, 0.0
        %v424 = vsel %vm233, %v408, 0.0
        %v425 = vsel %vm234, %v409, 0.0
        %v426 = vsel %vm234, %v410, 0.0
        %v427 = vsel %vm235, %v411, 0.0
        %v428 = vsel %vm235, %v412, 0.0
        %v429 = vsel %vm236, %v413, 0.0
        %v430 = vsel %vm236, %v414, 0.0
        %v431 = vsel %vm149, %v415, 0.0
        %v432 = vsel %vm149, %v417, 0.0
        %v433 = vadd.f32 %v431, %v432
        %v434 = vsel %vm149, %v419, 0.0
        %v435 = vadd.f32 %v433, %v434
        %v436 = vsel %vm149, %v421, 0.0
        %v437 = vadd.f32 %v435, %v436
        %v438 = vsel %vm149, %v423, 0.0
        %v439 = vadd.f32 %v437, %v438
        %v440 = vsel %vm149, %v425, 0.0
        %v441 = vadd.f32 %v439, %v440
        %v442 = vsel %vm149, %v427, 0.0
        %v443 = vadd.f32 %v441, %v442
        %v444 = vsel %vm149, %v429, 0.0
        %v445 = vadd.f32 %v443, %v444
        %v446 = vsel %vm268, %v416, 0.0
        %v447 = vsel %vm268, %v418, 0.0
        %v448 = vadd.f32 %v446, %v447
        %v449 = vsel %vm268, %v420, 0.0
        %v450 = vadd.f32 %v448, %v449
        %v451 = vsel %vm268, %v422, 0.0
        %v452 = vadd.f32 %v450, %v451
        %v453 = vsel %vm268, %v424, 0.0
        %v454 = vadd.f32 %v452, %v453
        %v455 = vsel %vm268, %v426, 0.0
        %v456 = vadd.f32 %v454, %v455
        %v457 = vsel %vm268, %v428, 0.0
        %v458 = vadd.f32 %v456, %v457
        %v459 = vsel %vm268, %v430, 0.0
        %v460 = vadd.f32 %v458, %v459
        %v461 = vsel %vm187, %v445, 0.0
        %v462 = vsel %vm188, %v460, 0.0
        %v463 = vsel %vm189, %v445, 0.0
        %v464 = vsel %vm190, %v460, 0.0
        %v465 = vsel %vm191, %v445, 0.0
        %v466 = vsel %vm192, %v460, 0.0
        %v467 = vsel %vm193, %v445, 0.0
        %v468 = vsel %vm194, %v460, 0.0
        %v469 = vsel %vm195, %v445, 0.0
        %v470 = vsel %vm196, %v460, 0.0
        %v471 = vsel %vm197, %v445, 0.0
        %v472 = vsel %vm198, %v460, 0.0
        %v473 = vsel %vm199, %v445, 0.0
        %v474 = vsel %vm200, %v460, 0.0
        %v475 = vsel %vm201, %v445, 0.0
        %v476 = vsel %vm202, %v460, 0.0
        %v477 = vsel %vm149, %v461, 0.0
        %v478 = vsel %vm268, %v462, 0.0
        %v479 = vadd.f32 %v477, %v478
        %v480 = vrot.slane %v479, 4
        %v481 = vadd.f32 %v479, %v480
        %v482 = vrot.slane %v481, 2
        %v483 = vadd.f32 %v481, %v482
        %v484 = vrot.slane %v483, 1
        %v485 = vadd.f32 %v483, %v484
        %v486 = vsel %vm149, %v463, 0.0
        %v487 = vsel %vm268, %v464, 0.0
        %v488 = vadd.f32 %v486, %v487
        %v489 = vrot.slane %v488, 4
        %v490 = vadd.f32 %v488, %v489
        %v491 = vrot.slane %v490, 2
        %v492 = vadd.f32 %v490, %v491
        %v493 = vrot.slane %v492, 1
        %v494 = vadd.f32 %v492, %v493
        %v495 = vsel %vm149, %v465, 0.0
        %v496 = vsel %vm268, %v466, 0.0
        %v497 = vadd.f32 %v495, %v496
        %v498 = vrot.slane %v497, 4
        %v499 = vadd.f32 %v497, %v498
        %v500 = vrot.slane %v499, 2
        %v501 = vadd.f32 %v499, %v500
        %v502 = vrot.slane %v501, 1
        %v503 = vadd.f32 %v501, %v502
        %v504 = vsel %vm149, %v467, 0.0
        %v505 = vsel %vm268, %v468, 0.0
        %v506 = vadd.f32 %v504, %v505
        %v507 = vrot.slane %v506, 4
        %v508 = vadd.f32 %v506, %v507
        %v509 = vrot.slane %v508, 2
        %v510 = vadd.f32 %v508, %v509
        %v511 = vrot.slane %v510, 1
        %v512 = vadd.f32 %v510, %v511
        %v513 = vsel %vm149, %v469, 0.0
        %v514 = vsel %vm268, %v470, 0.0
        %v515 = vadd.f32 %v513, %v514
        %v516 = vrot.slane %v515, 4
        %v517 = vadd.f32 %v515, %v516
        %v518 = vrot.slane %v517, 2
        %v519 = vadd.f32 %v517, %v518
        %v520 = vrot.slane %v519, 1
        %v521 = vadd.f32 %v519, %v520
        %v522 = vsel %vm149, %v471, 0.0
        %v523 = vsel %vm268, %v472, 0.0
        %v524 = vadd.f32 %v522, %v523
        %v525 = vrot.slane %v524, 4
        %v526 = vadd.f32 %v524, %v525
        %v527 = vrot.slane %v526, 2
        %v528 = vadd.f32 %v526, %v527
        %v529 = vrot.slane %v528, 1
        %v530 = vadd.f32 %v528, %v529
        %v531 = vsel %vm149, %v473, 0.0
        %v532 = vsel %vm268, %v474, 0.0
        %v533 = vadd.f32 %v531, %v532
        %v534 = vrot.slane %v533, 4
        %v535 = vadd.f32 %v533, %v534
        %v536 = vrot.slane %v535, 2
        %v537 = vadd.f32 %v535, %v536
        %v538 = vrot.slane %v537, 1
        %v539 = vadd.f32 %v537, %v538
        %v540 = vsel %vm149, %v475, 0.0
        %v541 = vsel %vm268, %v476, 0.0
        %v542 = vadd.f32 %v540, %v541
        %v543 = vrot.slane %v542, 4
        %v544 = vadd.f32 %v542, %v543
        %v545 = vrot.slane %v544, 2
        %v546 = vadd.f32 %v544, %v545
        %v547 = vrot.slane %v546, 1
        %v548 = vadd.f32 %v546, %v547
        %v557 = vsel %vm380, %v494, %v485
        %v558 = vsel %vm382, %v503, %v557
        %v559 = vsel %vm384, %v512, %v558
        %v560 = vsel %vm386, %v521, %v559
        %v561 = vsel %vm388, %v530, %v560
        %v562 = vsel %vm390, %v539, %v561
        %v563 = vsel %vm392, %v548, %v562
        %565 = vst.msk [vmem:[%s123 + $0x8] sm:$0xff] %vm149, %v563
        %s566 = sadd.s32 %s130, 2
        %s567 = smul.u32 %s566, 16
        %s568 = scalar_lea.vmem %s128, %s567
        %v569 = vld [vmem:[%s568] sm:$0xff]
        %v570 = vld [vmem:[%s568 + $0x8] sm:$0x7f]
        %v571 = vld [vmem:[%s568 + $0x10] sm:$0xff]
        %v572 = vld [vmem:[%s568 + $0x18] sm:$0x7f]
        %v573 = vld [vmem:[%s568 + $0x20] sm:$0xff]
        %v574 = vld [vmem:[%s568 + $0x28] sm:$0x7f]
        %v575 = vld [vmem:[%s568 + $0x30] sm:$0xff]
        %v576 = vld [vmem:[%s568 + $0x38] sm:$0x7f]
        %v577 = vld [vmem:[%s568 + $0x40] sm:$0xff]
        %v578 = vld [vmem:[%s568 + $0x48] sm:$0x7f]
        %v579 = vld [vmem:[%s568 + $0x50] sm:$0xff]
        %v580 = vld [vmem:[%s568 + $0x58] sm:$0x7f]
        %v581 = vld [vmem:[%s568 + $0x60] sm:$0xff]
        %v582 = vld [vmem:[%s568 + $0x68] sm:$0x7f]
        %v583 = vld [vmem:[%s568 + $0x70] sm:$0xff]
        %v584 = vld [vmem:[%s568 + $0x78] sm:$0x7f]
        %v585 = vsel %vm229, %v569, 0.0
        %v586 = vsel %vm229, %v570, 0.0
        %v587 = vsel %vm230, %v571, 0.0
        %v588 = vsel %vm230, %v572, 0.0
        %v589 = vsel %vm231, %v573, 0.0
        %v590 = vsel %vm231, %v574, 0.0
        %v591 = vsel %vm232, %v575, 0.0
        %v592 = vsel %vm232, %v576, 0.0
        %v593 = vsel %vm233, %v577, 0.0
        %v594 = vsel %vm233, %v578, 0.0
        %v595 = vsel %vm234, %v579, 0.0
        %v596 = vsel %vm234, %v580, 0.0
        %v597 = vsel %vm235, %v581, 0.0
        %v598 = vsel %vm235, %v582, 0.0
        %v599 = vsel %vm236, %v583, 0.0
        %v600 = vsel %vm236, %v584, 0.0
        %v601 = vsel %vm149, %v585, 0.0
        %v602 = vsel %vm149, %v587, 0.0
        %v603 = vadd.f32 %v601, %v602
        %v604 = vsel %vm149, %v589, 0.0
        %v605 = vadd.f32 %v603, %v604
        %v606 = vsel %vm149, %v591, 0.0
        %v607 = vadd.f32 %v605, %v606
        %v608 = vsel %vm149, %v593, 0.0
        %v609 = vadd.f32 %v607, %v608
        %v610 = vsel %vm149, %v595, 0.0
        %v611 = vadd.f32 %v609, %v610
        %v612 = vsel %vm149, %v597, 0.0
        %v613 = vadd.f32 %v611, %v612
        %v614 = vsel %vm149, %v599, 0.0
        %v615 = vadd.f32 %v613, %v614
        %v616 = vsel %vm268, %v586, 0.0
        %v617 = vsel %vm268, %v588, 0.0
        %v618 = vadd.f32 %v616, %v617
        %v619 = vsel %vm268, %v590, 0.0
        %v620 = vadd.f32 %v618, %v619
        %v621 = vsel %vm268, %v592, 0.0
        %v622 = vadd.f32 %v620, %v621
        %v623 = vsel %vm268, %v594, 0.0
        %v624 = vadd.f32 %v622, %v623
        %v625 = vsel %vm268, %v596, 0.0
        %v626 = vadd.f32 %v624, %v625
        %v627 = vsel %vm268, %v598, 0.0
        %v628 = vadd.f32 %v626, %v627
        %v629 = vsel %vm268, %v600, 0.0
        %v630 = vadd.f32 %v628, %v629
        %v631 = vsel %vm187, %v615, 0.0
        %v632 = vsel %vm188, %v630, 0.0
        %v633 = vsel %vm189, %v615, 0.0
        %v634 = vsel %vm190, %v630, 0.0
        %v635 = vsel %vm191, %v615, 0.0
        %v636 = vsel %vm192, %v630, 0.0
        %v637 = vsel %vm193, %v615, 0.0
        %v638 = vsel %vm194, %v630, 0.0
        %v639 = vsel %vm195, %v615, 0.0
        %v640 = vsel %vm196, %v630, 0.0
        %v641 = vsel %vm197, %v615, 0.0
        %v642 = vsel %vm198, %v630, 0.0
        %v643 = vsel %vm199, %v615, 0.0
        %v644 = vsel %vm200, %v630, 0.0
        %v645 = vsel %vm201, %v615, 0.0
        %v646 = vsel %vm202, %v630, 0.0
        %v647 = vsel %vm149, %v631, 0.0
        %v648 = vsel %vm268, %v632, 0.0
        %v649 = vadd.f32 %v647, %v648
        %v650 = vrot.slane %v649, 4
        %v651 = vadd.f32 %v649, %v650
        %v652 = vrot.slane %v651, 2
        %v653 = vadd.f32 %v651, %v652
        %v654 = vrot.slane %v653, 1
        %v655 = vadd.f32 %v653, %v654
        %v656 = vsel %vm149, %v633, 0.0
        %v657 = vsel %vm268, %v634, 0.0
        %v658 = vadd.f32 %v656, %v657
        %v659 = vrot.slane %v658, 4
        %v660 = vadd.f32 %v658, %v659
        %v661 = vrot.slane %v660, 2
        %v662 = vadd.f32 %v660, %v661
        %v663 = vrot.slane %v662, 1
        %v664 = vadd.f32 %v662, %v663
        %v665 = vsel %vm149, %v635, 0.0
        %v666 = vsel %vm268, %v636, 0.0
        %v667 = vadd.f32 %v665, %v666
        %v668 = vrot.slane %v667, 4
        %v669 = vadd.f32 %v667, %v668
        %v670 = vrot.slane %v669, 2
        %v671 = vadd.f32 %v669, %v670
        %v672 = vrot.slane %v671, 1
        %v673 = vadd.f32 %v671, %v672
        %v674 = vsel %vm149, %v637, 0.0
        %v675 = vsel %vm268, %v638, 0.0
        %v676 = vadd.f32 %v674, %v675
        %v677 = vrot.slane %v676, 4
        %v678 = vadd.f32 %v676, %v677
        %v679 = vrot.slane %v678, 2
        %v680 = vadd.f32 %v678, %v679
        %v681 = vrot.slane %v680, 1
        %v682 = vadd.f32 %v680, %v681
        %v683 = vsel %vm149, %v639, 0.0
        %v684 = vsel %vm268, %v640, 0.0
        %v685 = vadd.f32 %v683, %v684
        %v686 = vrot.slane %v685, 4
        %v687 = vadd.f32 %v685, %v686
        %v688 = vrot.slane %v687, 2
        %v689 = vadd.f32 %v687, %v688
        %v690 = vrot.slane %v689, 1
        %v691 = vadd.f32 %v689, %v690
        %v692 = vsel %vm149, %v641, 0.0
        %v693 = vsel %vm268, %v642, 0.0
        %v694 = vadd.f32 %v692, %v693
        %v695 = vrot.slane %v694, 4
        %v696 = vadd.f32 %v694, %v695
        %v697 = vrot.slane %v696, 2
        %v698 = vadd.f32 %v696, %v697
        %v699 = vrot.slane %v698, 1
        %v700 = vadd.f32 %v698, %v699
        %v701 = vsel %vm149, %v643, 0.0
        %v702 = vsel %vm268, %v644, 0.0
        %v703 = vadd.f32 %v701, %v702
        %v704 = vrot.slane %v703, 4
        %v705 = vadd.f32 %v703, %v704
        %v706 = vrot.slane %v705, 2
        %v707 = vadd.f32 %v705, %v706
        %v708 = vrot.slane %v707, 1
        %v709 = vadd.f32 %v707, %v708
        %v710 = vsel %vm149, %v645, 0.0
        %v711 = vsel %vm268, %v646, 0.0
        %v712 = vadd.f32 %v710, %v711
        %v713 = vrot.slane %v712, 4
        %v714 = vadd.f32 %v712, %v713
        %v715 = vrot.slane %v714, 2
        %v716 = vadd.f32 %v714, %v715
        %v717 = vrot.slane %v716, 1
        %v718 = vadd.f32 %v716, %v717
        %v727 = vsel %vm380, %v664, %v655
        %v728 = vsel %vm382, %v673, %v727
        %v729 = vsel %vm384, %v682, %v728
        %v730 = vsel %vm386, %v691, %v729
        %v731 = vsel %vm388, %v700, %v730
        %v732 = vsel %vm390, %v709, %v731
        %v733 = vsel %vm392, %v718, %v732
        %735 = vst.msk [vmem:[%s123 + $0x10] sm:$0xff] %vm149, %v733
        %s736 = sadd.s32 %s130, 3
        %s737 = smul.u32 %s736, 16
        %s738 = scalar_lea.vmem %s128, %s737
        %v739 = vld [vmem:[%s738] sm:$0xff]
        %v740 = vld [vmem:[%s738 + $0x8] sm:$0x7f]
        %v741 = vld [vmem:[%s738 + $0x10] sm:$0xff]
        %v742 = vld [vmem:[%s738 + $0x18] sm:$0x7f]
        %v743 = vld [vmem:[%s738 + $0x20] sm:$0xff]
        %v744 = vld [vmem:[%s738 + $0x28] sm:$0x7f]
        %v745 = vld [vmem:[%s738 + $0x30] sm:$0xff]
        %v746 = vld [vmem:[%s738 + $0x38] sm:$0x7f]
        %v747 = vld [vmem:[%s738 + $0x40] sm:$0xff]
        %v748 = vld [vmem:[%s738 + $0x48] sm:$0x7f]
        %v749 = vld [vmem:[%s738 + $0x50] sm:$0xff]
        %v750 = vld [vmem:[%s738 + $0x58] sm:$0x7f]
        %v751 = vld [vmem:[%s738 + $0x60] sm:$0xff]
        %v752 = vld [vmem:[%s738 + $0x68] sm:$0x7f]
        %v753 = vld [vmem:[%s738 + $0x70] sm:$0xff]
        %v754 = vld [vmem:[%s738 + $0x78] sm:$0x7f]
        %v755 = vsel %vm229, %v739, 0.0
        %v756 = vsel %vm229, %v740, 0.0
        %v757 = vsel %vm230, %v741, 0.0
        %v758 = vsel %vm230, %v742, 0.0
        %v759 = vsel %vm231, %v743, 0.0
        %v760 = vsel %vm231, %v744, 0.0
        %v761 = vsel %vm232, %v745, 0.0
        %v762 = vsel %vm232, %v746, 0.0
        %v763 = vsel %vm233, %v747, 0.0
        %v764 = vsel %vm233, %v748, 0.0
        %v765 = vsel %vm234, %v749, 0.0
        %v766 = vsel %vm234, %v750, 0.0
        %v767 = vsel %vm235, %v751, 0.0
        %v768 = vsel %vm235, %v752, 0.0
        %v769 = vsel %vm236, %v753, 0.0
        %v770 = vsel %vm236, %v754, 0.0
        %v771 = vsel %vm149, %v755, 0.0
        %v772 = vsel %vm149, %v757, 0.0
        %v773 = vadd.f32 %v771, %v772
        %v774 = vsel %vm149, %v759, 0.0
        %v775 = vadd.f32 %v773, %v774
        %v776 = vsel %vm149, %v761, 0.0
        %v777 = vadd.f32 %v775, %v776
        %v778 = vsel %vm149, %v763, 0.0
        %v779 = vadd.f32 %v777, %v778
        %v780 = vsel %vm149, %v765, 0.0
        %v781 = vadd.f32 %v779, %v780
        %v782 = vsel %vm149, %v767, 0.0
        %v783 = vadd.f32 %v781, %v782
        %v784 = vsel %vm149, %v769, 0.0
        %v785 = vadd.f32 %v783, %v784
        %v786 = vsel %vm268, %v756, 0.0
        %v787 = vsel %vm268, %v758, 0.0
        %v788 = vadd.f32 %v786, %v787
        %v789 = vsel %vm268, %v760, 0.0
        %v790 = vadd.f32 %v788, %v789
        %v791 = vsel %vm268, %v762, 0.0
        %v792 = vadd.f32 %v790, %v791
        %v793 = vsel %vm268, %v764, 0.0
        %v794 = vadd.f32 %v792, %v793
        %v795 = vsel %vm268, %v766, 0.0
        %v796 = vadd.f32 %v794, %v795
        %v797 = vsel %vm268, %v768, 0.0
        %v798 = vadd.f32 %v796, %v797
        %v799 = vsel %vm268, %v770, 0.0
        %v800 = vadd.f32 %v798, %v799
        %v801 = vsel %vm187, %v785, 0.0
        %v802 = vsel %vm188, %v800, 0.0
        %v803 = vsel %vm189, %v785, 0.0
        %v804 = vsel %vm190, %v800, 0.0
        %v805 = vsel %vm191, %v785, 0.0
        %v806 = vsel %vm192, %v800, 0.0
        %v807 = vsel %vm193, %v785, 0.0
        %v808 = vsel %vm194, %v800, 0.0
        %v809 = vsel %vm195, %v785, 0.0
        %v810 = vsel %vm196, %v800, 0.0
        %v811 = vsel %vm197, %v785, 0.0
        %v812 = vsel %vm198, %v800, 0.0
        %v813 = vsel %vm199, %v785, 0.0
        %v814 = vsel %vm200, %v800, 0.0
        %v815 = vsel %vm201, %v785, 0.0
        %v816 = vsel %vm202, %v800, 0.0
        %v817 = vsel %vm149, %v801, 0.0
        %v818 = vsel %vm268, %v802, 0.0
        %v819 = vadd.f32 %v817, %v818
        %v820 = vrot.slane %v819, 4
        %v821 = vadd.f32 %v819, %v820
        %v822 = vrot.slane %v821, 2
        %v823 = vadd.f32 %v821, %v822
        %v824 = vrot.slane %v823, 1
        %v825 = vadd.f32 %v823, %v824
        %v826 = vsel %vm149, %v803, 0.0
        %v827 = vsel %vm268, %v804, 0.0
        %v828 = vadd.f32 %v826, %v827
        %v829 = vrot.slane %v828, 4
        %v830 = vadd.f32 %v828, %v829
        %v831 = vrot.slane %v830, 2
        %v832 = vadd.f32 %v830, %v831
        %v833 = vrot.slane %v832, 1
        %v834 = vadd.f32 %v832, %v833
        %v835 = vsel %vm149, %v805, 0.0
        %v836 = vsel %vm268, %v806, 0.0
        %v837 = vadd.f32 %v835, %v836
        %v838 = vrot.slane %v837, 4
        %v839 = vadd.f32 %v837, %v838
        %v840 = vrot.slane %v839, 2
        %v841 = vadd.f32 %v839, %v840
        %v842 = vrot.slane %v841, 1
        %v843 = vadd.f32 %v841, %v842
        %v844 = vsel %vm149, %v807, 0.0
        %v845 = vsel %vm268, %v808, 0.0
        %v846 = vadd.f32 %v844, %v845
        %v847 = vrot.slane %v846, 4
        %v848 = vadd.f32 %v846, %v847
        %v849 = vrot.slane %v848, 2
        %v850 = vadd.f32 %v848, %v849
        %v851 = vrot.slane %v850, 1
        %v852 = vadd.f32 %v850, %v851
        %v853 = vsel %vm149, %v809, 0.0
        %v854 = vsel %vm268, %v810, 0.0
        %v855 = vadd.f32 %v853, %v854
        %v856 = vrot.slane %v855, 4
        %v857 = vadd.f32 %v855, %v856
        %v858 = vrot.slane %v857, 2
        %v859 = vadd.f32 %v857, %v858
        %v860 = vrot.slane %v859, 1
        %v861 = vadd.f32 %v859, %v860
        %v862 = vsel %vm149, %v811, 0.0
        %v863 = vsel %vm268, %v812, 0.0
        %v864 = vadd.f32 %v862, %v863
        %v865 = vrot.slane %v864, 4
        %v866 = vadd.f32 %v864, %v865
        %v867 = vrot.slane %v866, 2
        %v868 = vadd.f32 %v866, %v867
        %v869 = vrot.slane %v868, 1
        %v870 = vadd.f32 %v868, %v869
        %v871 = vsel %vm149, %v813, 0.0
        %v872 = vsel %vm268, %v814, 0.0
        %v873 = vadd.f32 %v871, %v872
        %v874 = vrot.slane %v873, 4
        %v875 = vadd.f32 %v873, %v874
        %v876 = vrot.slane %v875, 2
        %v877 = vadd.f32 %v875, %v876
        %v878 = vrot.slane %v877, 1
        %v879 = vadd.f32 %v877, %v878
        %v880 = vsel %vm149, %v815, 0.0
        %v881 = vsel %vm268, %v816, 0.0
        %v882 = vadd.f32 %v880, %v881
        %v883 = vrot.slane %v882, 4
        %v884 = vadd.f32 %v882, %v883
        %v885 = vrot.slane %v884, 2
        %v886 = vadd.f32 %v884, %v885
        %v887 = vrot.slane %v886, 1
        %v888 = vadd.f32 %v886, %v887
        %v897 = vsel %vm380, %v834, %v825
        %v898 = vsel %vm382, %v843, %v897
        %v899 = vsel %vm384, %v852, %v898
        %v900 = vsel %vm386, %v861, %v899
        %v901 = vsel %vm388, %v870, %v900
        %v902 = vsel %vm390, %v879, %v901
        %v903 = vsel %vm392, %v888, %v902
        %905 = vst.msk [vmem:[%s123 + $0x18] sm:$0xff] %vm149, %v903
        %s906 = sadd.s32 %s130, 4
        %s907 = smul.u32 %s906, 16
        %s908 = scalar_lea.vmem %s128, %s907
        %v909 = vld [vmem:[%s908] sm:$0xff]
        %v910 = vld [vmem:[%s908 + $0x8] sm:$0x7f]
        %v911 = vld [vmem:[%s908 + $0x10] sm:$0xff]
        %v912 = vld [vmem:[%s908 + $0x18] sm:$0x7f]
        %v913 = vld [vmem:[%s908 + $0x20] sm:$0xff]
        %v914 = vld [vmem:[%s908 + $0x28] sm:$0x7f]
        %v915 = vld [vmem:[%s908 + $0x30] sm:$0xff]
        %v916 = vld [vmem:[%s908 + $0x38] sm:$0x7f]
        %v917 = vld [vmem:[%s908 + $0x40] sm:$0xff]
        %v918 = vld [vmem:[%s908 + $0x48] sm:$0x7f]
        %v919 = vld [vmem:[%s908 + $0x50] sm:$0xff]
        %v920 = vld [vmem:[%s908 + $0x58] sm:$0x7f]
        %v921 = vld [vmem:[%s908 + $0x60] sm:$0xff]
        %v922 = vld [vmem:[%s908 + $0x68] sm:$0x7f]
        %v923 = vld [vmem:[%s908 + $0x70] sm:$0xff]
        %v924 = vld [vmem:[%s908 + $0x78] sm:$0x7f]
        %v925 = vsel %vm229, %v909, 0.0
        %v926 = vsel %vm229, %v910, 0.0
        %v927 = vsel %vm230, %v911, 0.0
        %v928 = vsel %vm230, %v912, 0.0
        %v929 = vsel %vm231, %v913, 0.0
        %v930 = vsel %vm231, %v914, 0.0
        %v931 = vsel %vm232, %v915, 0.0
        %v932 = vsel %vm232, %v916, 0.0
        %v933 = vsel %vm233, %v917, 0.0
        %v934 = vsel %vm233, %v918, 0.0
        %v935 = vsel %vm234, %v919, 0.0
        %v936 = vsel %vm234, %v920, 0.0
        %v937 = vsel %vm235, %v921, 0.0
        %v938 = vsel %vm235, %v922, 0.0
        %v939 = vsel %vm236, %v923, 0.0
        %v940 = vsel %vm236, %v924, 0.0
        %v941 = vsel %vm149, %v925, 0.0
        %v942 = vsel %vm149, %v927, 0.0
        %v943 = vadd.f32 %v941, %v942
        %v944 = vsel %vm149, %v929, 0.0
        %v945 = vadd.f32 %v943, %v944
        %v946 = vsel %vm149, %v931, 0.0
        %v947 = vadd.f32 %v945, %v946
        %v948 = vsel %vm149, %v933, 0.0
        %v949 = vadd.f32 %v947, %v948
        %v950 = vsel %vm149, %v935, 0.0
        %v951 = vadd.f32 %v949, %v950
        %v952 = vsel %vm149, %v937, 0.0
        %v953 = vadd.f32 %v951, %v952
        %v954 = vsel %vm149, %v939, 0.0
        %v955 = vadd.f32 %v953, %v954
        %v956 = vsel %vm268, %v926, 0.0
        %v957 = vsel %vm268, %v928, 0.0
        %v958 = vadd.f32 %v956, %v957
        %v959 = vsel %vm268, %v930, 0.0
        %v960 = vadd.f32 %v958, %v959
        %v961 = vsel %vm268, %v932, 0.0
        %v962 = vadd.f32 %v960, %v961
        %v963 = vsel %vm268, %v934, 0.0
        %v964 = vadd.f32 %v962, %v963
        %v965 = vsel %vm268, %v936, 0.0
        %v966 = vadd.f32 %v964, %v965
        %v967 = vsel %vm268, %v938, 0.0
        %v968 = vadd.f32 %v966, %v967
        %v969 = vsel %vm268, %v940, 0.0
        %v970 = vadd.f32 %v968, %v969
        %v971 = vsel %vm187, %v955, 0.0
        %v972 = vsel %vm188, %v970, 0.0
        %v973 = vsel %vm189, %v955, 0.0
        %v974 = vsel %vm190, %v970, 0.0
        %v975 = vsel %vm191, %v955, 0.0
        %v976 = vsel %vm192, %v970, 0.0
        %v977 = vsel %vm193, %v955, 0.0
        %v978 = vsel %vm194, %v970, 0.0
        %v979 = vsel %vm195, %v955, 0.0
        %v980 = vsel %vm196, %v970, 0.0
        %v981 = vsel %vm197, %v955, 0.0
        %v982 = vsel %vm198, %v970, 0.0
        %v983 = vsel %vm199, %v955, 0.0
        %v984 = vsel %vm200, %v970, 0.0
        %v985 = vsel %vm201, %v955, 0.0
        %v986 = vsel %vm202, %v970, 0.0
        %v987 = vsel %vm149, %v971, 0.0
        %v988 = vsel %vm268, %v972, 0.0
        %v989 = vadd.f32 %v987, %v988
        %v990 = vrot.slane %v989, 4
        %v991 = vadd.f32 %v989, %v990
        %v992 = vrot.slane %v991, 2
        %v993 = vadd.f32 %v991, %v992
        %v994 = vrot.slane %v993, 1
        %v995 = vadd.f32 %v993, %v994
        %v996 = vsel %vm149, %v973, 0.0
        %v997 = vsel %vm268, %v974, 0.0
        %v998 = vadd.f32 %v996, %v997
        %v999 = vrot.slane %v998, 4
        %v1000 = vadd.f32 %v998, %v999
        %v1001 = vrot.slane %v1000, 2
        %v1002 = vadd.f32 %v1000, %v1001
        %v1003 = vrot.slane %v1002, 1
        %v1004 = vadd.f32 %v1002, %v1003
        %v1005 = vsel %vm149, %v975, 0.0
        %v1006 = vsel %vm268, %v976, 0.0
        %v1007 = vadd.f32 %v1005, %v1006
        %v1008 = vrot.slane %v1007, 4
        %v1009 = vadd.f32 %v1007, %v1008
        %v1010 = vrot.slane %v1009, 2
        %v1011 = vadd.f32 %v1009, %v1010
        %v1012 = vrot.slane %v1011, 1
        %v1013 = vadd.f32 %v1011, %v1012
        %v1014 = vsel %vm149, %v977, 0.0
        %v1015 = vsel %vm268, %v978, 0.0
        %v1016 = vadd.f32 %v1014, %v1015
        %v1017 = vrot.slane %v1016, 4
        %v1018 = vadd.f32 %v1016, %v1017
        %v1019 = vrot.slane %v1018, 2
        %v1020 = vadd.f32 %v1018, %v1019
        %v1021 = vrot.slane %v1020, 1
        %v1022 = vadd.f32 %v1020, %v1021
        %v1023 = vsel %vm149, %v979, 0.0
        %v1024 = vsel %vm268, %v980, 0.0
        %v1025 = vadd.f32 %v1023, %v1024
        %v1026 = vrot.slane %v1025, 4
        %v1027 = vadd.f32 %v1025, %v1026
        %v1028 = vrot.slane %v1027, 2
        %v1029 = vadd.f32 %v1027, %v1028
        %v1030 = vrot.slane %v1029, 1
        %v1031 = vadd.f32 %v1029, %v1030
        %v1032 = vsel %vm149, %v981, 0.0
        %v1033 = vsel %vm268, %v982, 0.0
        %v1034 = vadd.f32 %v1032, %v1033
        %v1035 = vrot.slane %v1034, 4
        %v1036 = vadd.f32 %v1034, %v1035
        %v1037 = vrot.slane %v1036, 2
        %v1038 = vadd.f32 %v1036, %v1037
        %v1039 = vrot.slane %v1038, 1
        %v1040 = vadd.f32 %v1038, %v1039
        %v1041 = vsel %vm149, %v983, 0.0
        %v1042 = vsel %vm268, %v984, 0.0
        %v1043 = vadd.f32 %v1041, %v1042
        %v1044 = vrot.slane %v1043, 4
        %v1045 = vadd.f32 %v1043, %v1044
        %v1046 = vrot.slane %v1045, 2
        %v1047 = vadd.f32 %v1045, %v1046
        %v1048 = vrot.slane %v1047, 1
        %v1049 = vadd.f32 %v1047, %v1048
        %v1050 = vsel %vm149, %v985, 0.0
        %v1051 = vsel %vm268, %v986, 0.0
        %v1052 = vadd.f32 %v1050, %v1051
        %v1053 = vrot.slane %v1052, 4
        %v1054 = vadd.f32 %v1052, %v1053
        %v1055 = vrot.slane %v1054, 2
        %v1056 = vadd.f32 %v1054, %v1055
        %v1057 = vrot.slane %v1056, 1
        %v1058 = vadd.f32 %v1056, %v1057
        %v1067 = vsel %vm380, %v1004, %v995
        %v1068 = vsel %vm382, %v1013, %v1067
        %v1069 = vsel %vm384, %v1022, %v1068
        %v1070 = vsel %vm386, %v1031, %v1069
        %v1071 = vsel %vm388, %v1040, %v1070
        %v1072 = vsel %vm390, %v1049, %v1071
        %v1073 = vsel %vm392, %v1058, %v1072
        %1075 = vst.msk [vmem:[%s123 + $0x20] sm:$0xff] %vm149, %v1073
        %s1076 = sadd.s32 %s130, 5
        %s1077 = smul.u32 %s1076, 16
        %s1078 = scalar_lea.vmem %s128, %s1077
        %v1079 = vld [vmem:[%s1078] sm:$0xff]
        %v1080 = vld [vmem:[%s1078 + $0x8] sm:$0x7f]
        %v1081 = vld [vmem:[%s1078 + $0x10] sm:$0xff]
        %v1082 = vld [vmem:[%s1078 + $0x18] sm:$0x7f]
        %v1083 = vld [vmem:[%s1078 + $0x20] sm:$0xff]
        %v1084 = vld [vmem:[%s1078 + $0x28] sm:$0x7f]
        %v1085 = vld [vmem:[%s1078 + $0x30] sm:$0xff]
        %v1086 = vld [vmem:[%s1078 + $0x38] sm:$0x7f]
        %v1087 = vld [vmem:[%s1078 + $0x40] sm:$0xff]
        %v1088 = vld [vmem:[%s1078 + $0x48] sm:$0x7f]
        %v1089 = vld [vmem:[%s1078 + $0x50] sm:$0xff]
        %v1090 = vld [vmem:[%s1078 + $0x58] sm:$0x7f]
        %v1091 = vld [vmem:[%s1078 + $0x60] sm:$0xff]
        %v1092 = vld [vmem:[%s1078 + $0x68] sm:$0x7f]
        %v1093 = vld [vmem:[%s1078 + $0x70] sm:$0xff]
        %v1094 = vld [vmem:[%s1078 + $0x78] sm:$0x7f]
        %v1095 = vsel %vm229, %v1079, 0.0
        %v1096 = vsel %vm229, %v1080, 0.0
        %v1097 = vsel %vm230, %v1081, 0.0
        %v1098 = vsel %vm230, %v1082, 0.0
        %v1099 = vsel %vm231, %v1083, 0.0
        %v1100 = vsel %vm231, %v1084, 0.0
        %v1101 = vsel %vm232, %v1085, 0.0
        %v1102 = vsel %vm232, %v1086, 0.0
        %v1103 = vsel %vm233, %v1087, 0.0
        %v1104 = vsel %vm233, %v1088, 0.0
        %v1105 = vsel %vm234, %v1089, 0.0
        %v1106 = vsel %vm234, %v1090, 0.0
        %v1107 = vsel %vm235, %v1091, 0.0
        %v1108 = vsel %vm235, %v1092, 0.0
        %v1109 = vsel %vm236, %v1093, 0.0
        %v1110 = vsel %vm236, %v1094, 0.0
        %v1111 = vsel %vm149, %v1095, 0.0
        %v1112 = vsel %vm149, %v1097, 0.0
        %v1113 = vadd.f32 %v1111, %v1112
        %v1114 = vsel %vm149, %v1099, 0.0
        %v1115 = vadd.f32 %v1113, %v1114
        %v1116 = vsel %vm149, %v1101, 0.0
        %v1117 = vadd.f32 %v1115, %v1116
        %v1118 = vsel %vm149, %v1103, 0.0
        %v1119 = vadd.f32 %v1117, %v1118
        %v1120 = vsel %vm149, %v1105, 0.0
        %v1121 = vadd.f32 %v1119, %v1120
        %v1122 = vsel %vm149, %v1107, 0.0
        %v1123 = vadd.f32 %v1121, %v1122
        %v1124 = vsel %vm149, %v1109, 0.0
        %v1125 = vadd.f32 %v1123, %v1124
        %v1126 = vsel %vm268, %v1096, 0.0
        %v1127 = vsel %vm268, %v1098, 0.0
        %v1128 = vadd.f32 %v1126, %v1127
        %v1129 = vsel %vm268, %v1100, 0.0
        %v1130 = vadd.f32 %v1128, %v1129
        %v1131 = vsel %vm268, %v1102, 0.0
        %v1132 = vadd.f32 %v1130, %v1131
        %v1133 = vsel %vm268, %v1104, 0.0
        %v1134 = vadd.f32 %v1132, %v1133
        %v1135 = vsel %vm268, %v1106, 0.0
        %v1136 = vadd.f32 %v1134, %v1135
        %v1137 = vsel %vm268, %v1108, 0.0
        %v1138 = vadd.f32 %v1136, %v1137
        %v1139 = vsel %vm268, %v1110, 0.0
        %v1140 = vadd.f32 %v1138, %v1139
        %v1141 = vsel %vm187, %v1125, 0.0
        %v1142 = vsel %vm188, %v1140, 0.0
        %v1143 = vsel %vm189, %v1125, 0.0
        %v1144 = vsel %vm190, %v1140, 0.0
        %v1145 = vsel %vm191, %v1125, 0.0
        %v1146 = vsel %vm192, %v1140, 0.0
        %v1147 = vsel %vm193, %v1125, 0.0
        %v1148 = vsel %vm194, %v1140, 0.0
        %v1149 = vsel %vm195, %v1125, 0.0
        %v1150 = vsel %vm196, %v1140, 0.0
        %v1151 = vsel %vm197, %v1125, 0.0
        %v1152 = vsel %vm198, %v1140, 0.0
        %v1153 = vsel %vm199, %v1125, 0.0
        %v1154 = vsel %vm200, %v1140, 0.0
        %v1155 = vsel %vm201, %v1125, 0.0
        %v1156 = vsel %vm202, %v1140, 0.0
        %v1157 = vsel %vm149, %v1141, 0.0
        %v1158 = vsel %vm268, %v1142, 0.0
        %v1159 = vadd.f32 %v1157, %v1158
        %v1160 = vrot.slane %v1159, 4
        %v1161 = vadd.f32 %v1159, %v1160
        %v1162 = vrot.slane %v1161, 2
        %v1163 = vadd.f32 %v1161, %v1162
        %v1164 = vrot.slane %v1163, 1
        %v1165 = vadd.f32 %v1163, %v1164
        %v1166 = vsel %vm149, %v1143, 0.0
        %v1167 = vsel %vm268, %v1144, 0.0
        %v1168 = vadd.f32 %v1166, %v1167
        %v1169 = vrot.slane %v1168, 4
        %v1170 = vadd.f32 %v1168, %v1169
        %v1171 = vrot.slane %v1170, 2
        %v1172 = vadd.f32 %v1170, %v1171
        %v1173 = vrot.slane %v1172, 1
        %v1174 = vadd.f32 %v1172, %v1173
        %v1175 = vsel %vm149, %v1145, 0.0
        %v1176 = vsel %vm268, %v1146, 0.0
        %v1177 = vadd.f32 %v1175, %v1176
        %v1178 = vrot.slane %v1177, 4
        %v1179 = vadd.f32 %v1177, %v1178
        %v1180 = vrot.slane %v1179, 2
        %v1181 = vadd.f32 %v1179, %v1180
        %v1182 = vrot.slane %v1181, 1
        %v1183 = vadd.f32 %v1181, %v1182
        %v1184 = vsel %vm149, %v1147, 0.0
        %v1185 = vsel %vm268, %v1148, 0.0
        %v1186 = vadd.f32 %v1184, %v1185
        %v1187 = vrot.slane %v1186, 4
        %v1188 = vadd.f32 %v1186, %v1187
        %v1189 = vrot.slane %v1188, 2
        %v1190 = vadd.f32 %v1188, %v1189
        %v1191 = vrot.slane %v1190, 1
        %v1192 = vadd.f32 %v1190, %v1191
        %v1193 = vsel %vm149, %v1149, 0.0
        %v1194 = vsel %vm268, %v1150, 0.0
        %v1195 = vadd.f32 %v1193, %v1194
        %v1196 = vrot.slane %v1195, 4
        %v1197 = vadd.f32 %v1195, %v1196
        %v1198 = vrot.slane %v1197, 2
        %v1199 = vadd.f32 %v1197, %v1198
        %v1200 = vrot.slane %v1199, 1
        %v1201 = vadd.f32 %v1199, %v1200
        %v1202 = vsel %vm149, %v1151, 0.0
        %v1203 = vsel %vm268, %v1152, 0.0
        %v1204 = vadd.f32 %v1202, %v1203
        %v1205 = vrot.slane %v1204, 4
        %v1206 = vadd.f32 %v1204, %v1205
        %v1207 = vrot.slane %v1206, 2
        %v1208 = vadd.f32 %v1206, %v1207
        %v1209 = vrot.slane %v1208, 1
        %v1210 = vadd.f32 %v1208, %v1209
        %v1211 = vsel %vm149, %v1153, 0.0
        %v1212 = vsel %vm268, %v1154, 0.0
        %v1213 = vadd.f32 %v1211, %v1212
        %v1214 = vrot.slane %v1213, 4
        %v1215 = vadd.f32 %v1213, %v1214
        %v1216 = vrot.slane %v1215, 2
        %v1217 = vadd.f32 %v1215, %v1216
        %v1218 = vrot.slane %v1217, 1
        %v1219 = vadd.f32 %v1217, %v1218
        %v1220 = vsel %vm149, %v1155, 0.0
        %v1221 = vsel %vm268, %v1156, 0.0
        %v1222 = vadd.f32 %v1220, %v1221
        %v1223 = vrot.slane %v1222, 4
        %v1224 = vadd.f32 %v1222, %v1223
        %v1225 = vrot.slane %v1224, 2
        %v1226 = vadd.f32 %v1224, %v1225
        %v1227 = vrot.slane %v1226, 1
        %v1228 = vadd.f32 %v1226, %v1227
        %v1237 = vsel %vm380, %v1174, %v1165
        %v1238 = vsel %vm382, %v1183, %v1237
        %v1239 = vsel %vm384, %v1192, %v1238
        %v1240 = vsel %vm386, %v1201, %v1239
        %v1241 = vsel %vm388, %v1210, %v1240
        %v1242 = vsel %vm390, %v1219, %v1241
        %v1243 = vsel %vm392, %v1228, %v1242
        %1245 = vst.msk [vmem:[%s123 + $0x28] sm:$0xff] %vm149, %v1243
        %s1246 = sadd.s32 %s130, 6
        %s1247 = smul.u32 %s1246, 16
        %s1248 = scalar_lea.vmem %s128, %s1247
        %v1249 = vld [vmem:[%s1248] sm:$0xff]
        %v1250 = vld [vmem:[%s1248 + $0x8] sm:$0x7f]
        %v1251 = vld [vmem:[%s1248 + $0x10] sm:$0xff]
        %v1252 = vld [vmem:[%s1248 + $0x18] sm:$0x7f]
        %v1253 = vld [vmem:[%s1248 + $0x20] sm:$0xff]
        %v1254 = vld [vmem:[%s1248 + $0x28] sm:$0x7f]
        %v1255 = vld [vmem:[%s1248 + $0x30] sm:$0xff]
        %v1256 = vld [vmem:[%s1248 + $0x38] sm:$0x7f]
        %v1257 = vld [vmem:[%s1248 + $0x40] sm:$0xff]
        %v1258 = vld [vmem:[%s1248 + $0x48] sm:$0x7f]
        %v1259 = vld [vmem:[%s1248 + $0x50] sm:$0xff]
        %v1260 = vld [vmem:[%s1248 + $0x58] sm:$0x7f]
        %v1261 = vld [vmem:[%s1248 + $0x60] sm:$0xff]
        %v1262 = vld [vmem:[%s1248 + $0x68] sm:$0x7f]
        %v1263 = vld [vmem:[%s1248 + $0x70] sm:$0xff]
        %v1264 = vld [vmem:[%s1248 + $0x78] sm:$0x7f]
        %v1265 = vsel %vm229, %v1249, 0.0
        %v1266 = vsel %vm229, %v1250, 0.0
        %v1267 = vsel %vm230, %v1251, 0.0
        %v1268 = vsel %vm230, %v1252, 0.0
        %v1269 = vsel %vm231, %v1253, 0.0
        %v1270 = vsel %vm231, %v1254, 0.0
        %v1271 = vsel %vm232, %v1255, 0.0
        %v1272 = vsel %vm232, %v1256, 0.0
        %v1273 = vsel %vm233, %v1257, 0.0
        %v1274 = vsel %vm233, %v1258, 0.0
        %v1275 = vsel %vm234, %v1259, 0.0
        %v1276 = vsel %vm234, %v1260, 0.0
        %v1277 = vsel %vm235, %v1261, 0.0
        %v1278 = vsel %vm235, %v1262, 0.0
        %v1279 = vsel %vm236, %v1263, 0.0
        %v1280 = vsel %vm236, %v1264, 0.0
        %v1281 = vsel %vm149, %v1265, 0.0
        %v1282 = vsel %vm149, %v1267, 0.0
        %v1283 = vadd.f32 %v1281, %v1282
        %v1284 = vsel %vm149, %v1269, 0.0
        %v1285 = vadd.f32 %v1283, %v1284
        %v1286 = vsel %vm149, %v1271, 0.0
        %v1287 = vadd.f32 %v1285, %v1286
        %v1288 = vsel %vm149, %v1273, 0.0
        %v1289 = vadd.f32 %v1287, %v1288
        %v1290 = vsel %vm149, %v1275, 0.0
        %v1291 = vadd.f32 %v1289, %v1290
        %v1292 = vsel %vm149, %v1277, 0.0
        %v1293 = vadd.f32 %v1291, %v1292
        %v1294 = vsel %vm149, %v1279, 0.0
        %v1295 = vadd.f32 %v1293, %v1294
        %v1296 = vsel %vm268, %v1266, 0.0
        %v1297 = vsel %vm268, %v1268, 0.0
        %v1298 = vadd.f32 %v1296, %v1297
        %v1299 = vsel %vm268, %v1270, 0.0
        %v1300 = vadd.f32 %v1298, %v1299
        %v1301 = vsel %vm268, %v1272, 0.0
        %v1302 = vadd.f32 %v1300, %v1301
        %v1303 = vsel %vm268, %v1274, 0.0
        %v1304 = vadd.f32 %v1302, %v1303
        %v1305 = vsel %vm268, %v1276, 0.0
        %v1306 = vadd.f32 %v1304, %v1305
        %v1307 = vsel %vm268, %v1278, 0.0
        %v1308 = vadd.f32 %v1306, %v1307
        %v1309 = vsel %vm268, %v1280, 0.0
        %v1310 = vadd.f32 %v1308, %v1309
        %v1311 = vsel %vm187, %v1295, 0.0
        %v1312 = vsel %vm188, %v1310, 0.0
        %v1313 = vsel %vm189, %v1295, 0.0
        %v1314 = vsel %vm190, %v1310, 0.0
        %v1315 = vsel %vm191, %v1295, 0.0
        %v1316 = vsel %vm192, %v1310, 0.0
        %v1317 = vsel %vm193, %v1295, 0.0
        %v1318 = vsel %vm194, %v1310, 0.0
        %v1319 = vsel %vm195, %v1295, 0.0
        %v1320 = vsel %vm196, %v1310, 0.0
        %v1321 = vsel %vm197, %v1295, 0.0
        %v1322 = vsel %vm198, %v1310, 0.0
        %v1323 = vsel %vm199, %v1295, 0.0
        %v1324 = vsel %vm200, %v1310, 0.0
        %v1325 = vsel %vm201, %v1295, 0.0
        %v1326 = vsel %vm202, %v1310, 0.0
        %v1327 = vsel %vm149, %v1311, 0.0
        %v1328 = vsel %vm268, %v1312, 0.0
        %v1329 = vadd.f32 %v1327, %v1328
        %v1330 = vrot.slane %v1329, 4
        %v1331 = vadd.f32 %v1329, %v1330
        %v1332 = vrot.slane %v1331, 2
        %v1333 = vadd.f32 %v1331, %v1332
        %v1334 = vrot.slane %v1333, 1
        %v1335 = vadd.f32 %v1333, %v1334
        %v1336 = vsel %vm149, %v1313, 0.0
        %v1337 = vsel %vm268, %v1314, 0.0
        %v1338 = vadd.f32 %v1336, %v1337
        %v1339 = vrot.slane %v1338, 4
        %v1340 = vadd.f32 %v1338, %v1339
        %v1341 = vrot.slane %v1340, 2
        %v1342 = vadd.f32 %v1340, %v1341
        %v1343 = vrot.slane %v1342, 1
        %v1344 = vadd.f32 %v1342, %v1343
        %v1345 = vsel %vm149, %v1315, 0.0
        %v1346 = vsel %vm268, %v1316, 0.0
        %v1347 = vadd.f32 %v1345, %v1346
        %v1348 = vrot.slane %v1347, 4
        %v1349 = vadd.f32 %v1347, %v1348
        %v1350 = vrot.slane %v1349, 2
        %v1351 = vadd.f32 %v1349, %v1350
        %v1352 = vrot.slane %v1351, 1
        %v1353 = vadd.f32 %v1351, %v1352
        %v1354 = vsel %vm149, %v1317, 0.0
        %v1355 = vsel %vm268, %v1318, 0.0
        %v1356 = vadd.f32 %v1354, %v1355
        %v1357 = vrot.slane %v1356, 4
        %v1358 = vadd.f32 %v1356, %v1357
        %v1359 = vrot.slane %v1358, 2
        %v1360 = vadd.f32 %v1358, %v1359
        %v1361 = vrot.slane %v1360, 1
        %v1362 = vadd.f32 %v1360, %v1361
        %v1363 = vsel %vm149, %v1319, 0.0
        %v1364 = vsel %vm268, %v1320, 0.0
        %v1365 = vadd.f32 %v1363, %v1364
        %v1366 = vrot.slane %v1365, 4
        %v1367 = vadd.f32 %v1365, %v1366
        %v1368 = vrot.slane %v1367, 2
        %v1369 = vadd.f32 %v1367, %v1368
        %v1370 = vrot.slane %v1369, 1
        %v1371 = vadd.f32 %v1369, %v1370
        %v1372 = vsel %vm149, %v1321, 0.0
        %v1373 = vsel %vm268, %v1322, 0.0
        %v1374 = vadd.f32 %v1372, %v1373
        %v1375 = vrot.slane %v1374, 4
        %v1376 = vadd.f32 %v1374, %v1375
        %v1377 = vrot.slane %v1376, 2
        %v1378 = vadd.f32 %v1376, %v1377
        %v1379 = vrot.slane %v1378, 1
        %v1380 = vadd.f32 %v1378, %v1379
        %v1381 = vsel %vm149, %v1323, 0.0
        %v1382 = vsel %vm268, %v1324, 0.0
        %v1383 = vadd.f32 %v1381, %v1382
        %v1384 = vrot.slane %v1383, 4
        %v1385 = vadd.f32 %v1383, %v1384
        %v1386 = vrot.slane %v1385, 2
        %v1387 = vadd.f32 %v1385, %v1386
        %v1388 = vrot.slane %v1387, 1
        %v1389 = vadd.f32 %v1387, %v1388
        %v1390 = vsel %vm149, %v1325, 0.0
        %v1391 = vsel %vm268, %v1326, 0.0
        %v1392 = vadd.f32 %v1390, %v1391
        %v1393 = vrot.slane %v1392, 4
        %v1394 = vadd.f32 %v1392, %v1393
        %v1395 = vrot.slane %v1394, 2
        %v1396 = vadd.f32 %v1394, %v1395
        %v1397 = vrot.slane %v1396, 1
        %v1398 = vadd.f32 %v1396, %v1397
        %v1407 = vsel %vm380, %v1344, %v1335
        %v1408 = vsel %vm382, %v1353, %v1407
        %v1409 = vsel %vm384, %v1362, %v1408
        %v1410 = vsel %vm386, %v1371, %v1409
        %v1411 = vsel %vm388, %v1380, %v1410
        %v1412 = vsel %vm390, %v1389, %v1411
        %v1413 = vsel %vm392, %v1398, %v1412
        %1415 = vst.msk [vmem:[%s123 + $0x30] sm:$0xff] %vm149, %v1413
        %s1416 = sadd.s32 %s130, 7
        %s1417 = smul.u32 %s1416, 16
        %s1418 = scalar_lea.vmem %s128, %s1417
        %v1419 = vld [vmem:[%s1418] sm:$0xff]
        %v1420 = vld [vmem:[%s1418 + $0x8] sm:$0x7f]
        %v1421 = vld [vmem:[%s1418 + $0x10] sm:$0xff]
        %v1422 = vld [vmem:[%s1418 + $0x18] sm:$0x7f]
        %v1423 = vld [vmem:[%s1418 + $0x20] sm:$0xff]
        %v1424 = vld [vmem:[%s1418 + $0x28] sm:$0x7f]
        %v1425 = vld [vmem:[%s1418 + $0x30] sm:$0xff]
        %v1426 = vld [vmem:[%s1418 + $0x38] sm:$0x7f]
        %v1427 = vld [vmem:[%s1418 + $0x40] sm:$0xff]
        %v1428 = vld [vmem:[%s1418 + $0x48] sm:$0x7f]
        %v1429 = vld [vmem:[%s1418 + $0x50] sm:$0xff]
        %v1430 = vld [vmem:[%s1418 + $0x58] sm:$0x7f]
        %v1431 = vld [vmem:[%s1418 + $0x60] sm:$0xff]
        %v1432 = vld [vmem:[%s1418 + $0x68] sm:$0x7f]
        %v1433 = vld [vmem:[%s1418 + $0x70] sm:$0xff]
        %v1434 = vld [vmem:[%s1418 + $0x78] sm:$0x7f]
        %v1435 = vsel %vm229, %v1419, 0.0
        %v1436 = vsel %vm229, %v1420, 0.0
        %v1437 = vsel %vm230, %v1421, 0.0
        %v1438 = vsel %vm230, %v1422, 0.0
        %v1439 = vsel %vm231, %v1423, 0.0
        %v1440 = vsel %vm231, %v1424, 0.0
        %v1441 = vsel %vm232, %v1425, 0.0
        %v1442 = vsel %vm232, %v1426, 0.0
        %v1443 = vsel %vm233, %v1427, 0.0
        %v1444 = vsel %vm233, %v1428, 0.0
        %v1445 = vsel %vm234, %v1429, 0.0
        %v1446 = vsel %vm234, %v1430, 0.0
        %v1447 = vsel %vm235, %v1431, 0.0
        %v1448 = vsel %vm235, %v1432, 0.0
        %v1449 = vsel %vm236, %v1433, 0.0
        %v1450 = vsel %vm236, %v1434, 0.0
        %v1451 = vsel %vm149, %v1435, 0.0
        %v1452 = vsel %vm149, %v1437, 0.0
        %v1453 = vadd.f32 %v1451, %v1452
        %v1454 = vsel %vm149, %v1439, 0.0
        %v1455 = vadd.f32 %v1453, %v1454
        %v1456 = vsel %vm149, %v1441, 0.0
        %v1457 = vadd.f32 %v1455, %v1456
        %v1458 = vsel %vm149, %v1443, 0.0
        %v1459 = vadd.f32 %v1457, %v1458
        %v1460 = vsel %vm149, %v1445, 0.0
        %v1461 = vadd.f32 %v1459, %v1460
        %v1462 = vsel %vm149, %v1447, 0.0
        %v1463 = vadd.f32 %v1461, %v1462
        %v1464 = vsel %vm149, %v1449, 0.0
        %v1465 = vadd.f32 %v1463, %v1464
        %v1466 = vsel %vm268, %v1436, 0.0
        %v1467 = vsel %vm268, %v1438, 0.0
        %v1468 = vadd.f32 %v1466, %v1467
        %v1469 = vsel %vm268, %v1440, 0.0
        %v1470 = vadd.f32 %v1468, %v1469
        %v1471 = vsel %vm268, %v1442, 0.0
        %v1472 = vadd.f32 %v1470, %v1471
        %v1473 = vsel %vm268, %v1444, 0.0
        %v1474 = vadd.f32 %v1472, %v1473
        %v1475 = vsel %vm268, %v1446, 0.0
        %v1476 = vadd.f32 %v1474, %v1475
        %v1477 = vsel %vm268, %v1448, 0.0
        %v1478 = vadd.f32 %v1476, %v1477
        %v1479 = vsel %vm268, %v1450, 0.0
        %v1480 = vadd.f32 %v1478, %v1479
        %v1481 = vsel %vm187, %v1465, 0.0
        %v1482 = vsel %vm188, %v1480, 0.0
        %v1483 = vsel %vm189, %v1465, 0.0
        %v1484 = vsel %vm190, %v1480, 0.0
        %v1485 = vsel %vm191, %v1465, 0.0
        %v1486 = vsel %vm192, %v1480, 0.0
        %v1487 = vsel %vm193, %v1465, 0.0
        %v1488 = vsel %vm194, %v1480, 0.0
        %v1489 = vsel %vm195, %v1465, 0.0
        %v1490 = vsel %vm196, %v1480, 0.0
        %v1491 = vsel %vm197, %v1465, 0.0
        %v1492 = vsel %vm198, %v1480, 0.0
        %v1493 = vsel %vm199, %v1465, 0.0
        %v1494 = vsel %vm200, %v1480, 0.0
        %v1495 = vsel %vm201, %v1465, 0.0
        %v1496 = vsel %vm202, %v1480, 0.0
        %v1497 = vsel %vm149, %v1481, 0.0
        %v1498 = vsel %vm268, %v1482, 0.0
        %v1499 = vadd.f32 %v1497, %v1498
        %v1500 = vrot.slane %v1499, 4
        %v1501 = vadd.f32 %v1499, %v1500
        %v1502 = vrot.slane %v1501, 2
        %v1503 = vadd.f32 %v1501, %v1502
        %v1504 = vrot.slane %v1503, 1
        %v1505 = vadd.f32 %v1503, %v1504
        %v1506 = vsel %vm149, %v1483, 0.0
        %v1507 = vsel %vm268, %v1484, 0.0
        %v1508 = vadd.f32 %v1506, %v1507
        %v1509 = vrot.slane %v1508, 4
        %v1510 = vadd.f32 %v1508, %v1509
        %v1511 = vrot.slane %v1510, 2
        %v1512 = vadd.f32 %v1510, %v1511
        %v1513 = vrot.slane %v1512, 1
        %v1514 = vadd.f32 %v1512, %v1513
        %v1515 = vsel %vm149, %v1485, 0.0
        %v1516 = vsel %vm268, %v1486, 0.0
        %v1517 = vadd.f32 %v1515, %v1516
        %v1518 = vrot.slane %v1517, 4
        %v1519 = vadd.f32 %v1517, %v1518
        %v1520 = vrot.slane %v1519, 2
        %v1521 = vadd.f32 %v1519, %v1520
        %v1522 = vrot.slane %v1521, 1
        %v1523 = vadd.f32 %v1521, %v1522
        %v1524 = vsel %vm149, %v1487, 0.0
        %v1525 = vsel %vm268, %v1488, 0.0
        %v1526 = vadd.f32 %v1524, %v1525
        %v1527 = vrot.slane %v1526, 4
        %v1528 = vadd.f32 %v1526, %v1527
        %v1529 = vrot.slane %v1528, 2
        %v1530 = vadd.f32 %v1528, %v1529
        %v1531 = vrot.slane %v1530, 1
        %v1532 = vadd.f32 %v1530, %v1531
        %v1533 = vsel %vm149, %v1489, 0.0
        %v1534 = vsel %vm268, %v1490, 0.0
        %v1535 = vadd.f32 %v1533, %v1534
        %v1536 = vrot.slane %v1535, 4
        %v1537 = vadd.f32 %v1535, %v1536
        %v1538 = vrot.slane %v1537, 2
        %v1539 = vadd.f32 %v1537, %v1538
        %v1540 = vrot.slane %v1539, 1
        %v1541 = vadd.f32 %v1539, %v1540
        %v1542 = vsel %vm149, %v1491, 0.0
        %v1543 = vsel %vm268, %v1492, 0.0
        %v1544 = vadd.f32 %v1542, %v1543
        %v1545 = vrot.slane %v1544, 4
        %v1546 = vadd.f32 %v1544, %v1545
        %v1547 = vrot.slane %v1546, 2
        %v1548 = vadd.f32 %v1546, %v1547
        %v1549 = vrot.slane %v1548, 1
        %v1550 = vadd.f32 %v1548, %v1549
        %v1551 = vsel %vm149, %v1493, 0.0
        %v1552 = vsel %vm268, %v1494, 0.0
        %v1553 = vadd.f32 %v1551, %v1552
        %v1554 = vrot.slane %v1553, 4
        %v1555 = vadd.f32 %v1553, %v1554
        %v1556 = vrot.slane %v1555, 2
        %v1557 = vadd.f32 %v1555, %v1556
        %v1558 = vrot.slane %v1557, 1
        %v1559 = vadd.f32 %v1557, %v1558
        %v1560 = vsel %vm149, %v1495, 0.0
        %v1561 = vsel %vm268, %v1496, 0.0
        %v1562 = vadd.f32 %v1560, %v1561
        %v1563 = vrot.slane %v1562, 4
        %v1564 = vadd.f32 %v1562, %v1563
        %v1565 = vrot.slane %v1564, 2
        %v1566 = vadd.f32 %v1564, %v1565
        %v1567 = vrot.slane %v1566, 1
        %v1568 = vadd.f32 %v1566, %v1567
        %v1577 = vsel %vm380, %v1514, %v1505
        %v1578 = vsel %vm382, %v1523, %v1577
        %v1579 = vsel %vm384, %v1532, %v1578
        %v1580 = vsel %vm386, %v1541, %v1579
        %v1581 = vsel %vm388, %v1550, %v1580
        %v1582 = vsel %vm390, %v1559, %v1581
        %v1583 = vsel %vm392, %v1568, %v1582
        %1585 = vst.msk [vmem:[%s123 + $0x38] sm:$0xff] %vm149, %v1583
        %s1586 = sand.u32 %s63, 1
        %s1587 = scalar_lea.sflag [#allocation3], %s1586
        %s1588 = sand.u32 %s63, 1
        %s1589 = smul.addr %s1588, 64
        %s1590 = scalar_lea.vmem [#allocation2], %s1589
        // Predicated region
        $region25: #{tpu_custom_call.1} parent=23 // pred_check
          %p1591 = pneg %p73
        $region26: #{tpu_custom_call.1} parent=23 // pred_check_branch
          %1593 = sbr.rel (%p1591) target = $region28
        $region27: #{tpu_custom_call.1} parent=23 // pred_region
          %s1594 = smul.u32 8, %s20
          %s1596 = ssub.s32 1024, 1024
          %1597 = vsyncadd %s1587, %s1596
          %s1598 = smul.addr %s19, 8
          %s1599 = sadd.s32 %s1594, %s1598
          %s1600 = smul.addr %s1599, 128
          %s1601 = scalar_lea.hbm %s1, %s1600
          %s1602 = sshll.u32 %s1590, 4
          %s1603 = int_to_ptr.vmem [resolvable:$true] %s1602
          %1608 = dma.vmem_to_hbm [thread:$0]  %s1603, 1024, %s1601, %s1587, 128, 128, 8
        $region28: #{tpu_custom_call.1} parent=23 // pred_fallthru
          _
      $region24: #{tpu_custom_call.1} parent=5 // pred_fallthru
        _
      %p1609 = scmp.le.s32.totalorder 2, %s10
      // Predicated region
      $region29: #{tpu_custom_call.1} parent=5 // pred_check
        %p1610 = pneg %p1609
      $region30: #{tpu_custom_call.1} parent=5 // pred_check_branch
        %1612 = sbr.rel (%p1610) target = $region32
      $region31: #{tpu_custom_call.1} parent=5 // pred_region
        %s1613 = ssub.s32 %s10, 2
        // Predicated region
        $region33: #{tpu_custom_call.1} parent=31 // pred_check
          %p1614 = pneg %p79
        $region34: #{tpu_custom_call.1} parent=31 // pred_check_branch
          %1616 = sbr.rel (%p1614) target = $region36
        $region35: #{tpu_custom_call.1} parent=31 // pred_region
          %s1617 = sand.u32 %s64, 1
          %s1618 = scalar_lea.sflag [#allocation3], %s1617
          %s1619 = sand.u32 %s64, 1
          %s1620 = smul.addr %s1619, 64
          %s1621 = scalar_lea.vmem [#allocation2], %s1620
          %1622 = dma.done %s1618, 1024
        $region36: #{tpu_custom_call.1} parent=31 // pred_fallthru
          _
      $region32: #{tpu_custom_call.1} parent=5 // pred_fallthru
        _
    $region6: #{tpu_custom_call.1} parent=1 // loop_footer
      %s14 = sadd.s32 1, %s10
    $region7: #{tpu_custom_call.1} parent=1 // loop_footer_branch
      %9 = sbr.rel target = $region3
    $region8: #{tpu_custom_call.1} parent=1 // loop_exit
      _
    %1623 = vsyncpa [#allocation3], 1
    %s1624 = scalar_lea.sflag [#allocation3], 1
    %1625 = vsyncpa %s1624, 1

</llo_original>
